<compile_context>
chip_gen: v7x
topology: tpu7x:2x2x1
jax: 0.10.0
libtpu: 0.0.40
codegen_flags: <defaults>
</compile_context>

<pallas_src>
import math

import jax
import jax.numpy as jnp
from jax import lax
from jax.experimental import pallas as pl
from jax.experimental.pallas import tpu as pltpu

EPS = 1e-4
SILU_DIV = 0.596

# Only split a fits-in-one-tile batch across v7x's two TensorCores when each half
# still has at least this many rows (otherwise the extra grid step is pure overhead).
_MEGACORE_MIN_ROWS = 2048


# --------------------------------------------------------------------------- kernel
def _sphere_mlp_kernel(x_ref, w1_ref, w2_ref, w3_ref, o_ref):
    x = x_ref[...].astype(jnp.float32)
    d_in = x.shape[-1]

    # rms_norm: x / (eps + ||x||/sqrt(D))  ≈  x * rsqrt(mean(x^2) + eps^2)
    # (single EUP rsqrt; dropping the 2*eps*||x||/sqrt(D) cross term is O(1e-4) rel.)
    sumsq = jnp.sum(x * x, axis=-1, keepdims=True)
    x = x * lax.rsqrt(sumsq * (1.0 / d_in) + EPS * EPS)

    # Weights arrive pre-unit-normalised, pre-transposed to (in, out), pre-scaled by
    # 1/0.596 where applicable, and already bf16 -> bf16 MXU matmuls, f32 accumulate.
    h = jnp.dot(x.astype(jnp.bfloat16), w1_ref[...],
                preferred_element_type=jnp.float32)
    # silu (1/0.596 folded into w2): exp -> EUP, approx reciprocal -> EUP.
    h = h * pl.reciprocal(1.0 + jnp.exp(-h), approx=True)
    h = jnp.dot(h.astype(jnp.bfloat16), w2_ref[...],
                preferred_element_type=jnp.float32)
    # silu (1/0.596 folded into w3)
    h = h * pl.reciprocal(1.0 + jnp.exp(-h), approx=True)
    h = jnp.dot(h.astype(jnp.bfloat16), w3_ref[...],
                preferred_element_type=jnp.float32)

    # final unit_norm: h / (eps + ||h||)  ≈  h * rsqrt(sum(h^2) + eps^2)
    osumsq = jnp.sum(h * h, axis=-1, keepdims=True)
    o_ref[...] = (h * lax.rsqrt(osumsq + EPS * EPS)).astype(o_ref.dtype)


# ------------------------------------------------------------------- weight prep
def _prep_weights(w1, w2, w3):
    """unit-normalise rows, fold SiLU scales, transpose to (in,out), cast to bf16."""
    def unit_norm_rows(w):
        w = w.astype(jnp.float32)
        n = jnp.sqrt(jnp.sum(w * w, axis=-1, keepdims=True))
        return w / (EPS + n)

    w1n = unit_norm_rows(w1)                         # (int, in)
    w2n = unit_norm_rows(w2) * (1.0 / SILU_DIV)      # fold layer-1 SiLU scale
    w3n = unit_norm_rows(w3) * (1.0 / SILU_DIV)      # fold layer-2 SiLU scale
    return (w1n.T.astype(jnp.bfloat16),              # (in,  int)
            w2n.T.astype(jnp.bfloat16),              # (int, out)
            w3n.T.astype(jnp.bfloat16))              # (out, out)


# ------------------------------------------------------------------- tiling policy
def _round_up(v, m):
    return ((v + m - 1) // m) * m


def _has_two_tensorcores():
    try:
        kind = jax.devices()[0].device_kind.lower()
    except Exception:
        return False
    return ("v7" in kind) or ("7x" in kind)


def _pick_tiling(B, requested, two_tensorcores):
    """Choose (batch_tile, num_steps, padded_batch).

    Never falls back to a tiny tile: the batch is padded so the tile need not
    divide it.  Single grid step whenever the batch fits in one tile, except on
    v7x with a large batch where a 2-way split feeds both TensorCores.
    """
    requested = max(8, _round_up(int(requested), 8))
    if _round_up(B, 8) <= requested:
        nsteps = 2 if (two_tensorcores and B >= _MEGACORE_MIN_ROWS) else 1
    else:
        nsteps = -(-B // requested)                   # cdiv -> near-equal tiles
    bt = _round_up(-(-B // nsteps), 8)
    return bt, nsteps, bt * nsteps


def _estimate_vmem_bytes(bt, d_in, int_dim, d_out):
    io = 2 * bt * (d_in + d_out) * 4                              # dbl-buffered x/out (f32)
    w = 2 * 2 * (d_in * int_dim + int_dim * d_out + d_out * d_out)  # bf16 weights
    tmp = bt * (d_in + 2 * int_dim + 2 * d_out) * 4               # elementwise temporaries
    return io + w + tmp


# ---------------------------------------------------------------------- entry point
def _sphere_mlp_call(x, w1t, w2t, w3t, batch_tile, two_tensorcores):
    B, d_in = x.shape
    int_dim = w1t.shape[1]
    d_out = w3t.shape[1]

    bt, nsteps, b_pad = _pick_tiling(B, batch_tile, two_tensorcores)
    x_in = jnp.pad(x, ((0, b_pad - B), (0, 0))) if b_pad != B else x

    compiler_kwargs = dict(dimension_semantics=("parallel",))
    est = _estimate_vmem_bytes(bt, d_in, int_dim, d_out)
    if est > 12 * 1024 * 1024:       # only needed for very large tiles (v5e default 16 MiB)
        compiler_kwargs["vmem_limit_bytes"] = min(2 * est, 48 * 1024 * 1024)

    out = pl.pallas_call(
        _sphere_mlp_kernel,
        out_shape=jax.ShapeDtypeStruct((b_pad, d_out), x.dtype),
        grid_spec=pltpu.PrefetchScalarGridSpec(
            num_scalar_prefetch=0,
            grid=(nsteps,),
            in_specs=[
                pl.BlockSpec((bt, d_in), lambda i: (i, 0)),
                # Weights fully VMEM-resident (constant index_map -> no re-DMA).
                pl.BlockSpec((d_in, int_dim), lambda i: (0, 0)),
                pl.BlockSpec((int_dim, d_out), lambda i: (0, 0)),
                pl.BlockSpec((d_out, d_out), lambda i: (0, 0)),
            ],
            out_specs=pl.BlockSpec((bt, d_out), lambda i: (i, 0)),
        ),
        compiler_params=pltpu.CompilerParams(**compiler_kwargs),
    )(x_in, w1t, w2t, w3t)

    return out[:B] if b_pad != B else out


def make_sphere_mlp(w1, w2, w3, *, batch_tile=4096):
    """Prep weights once (normalise/fold/transpose/cast) and return a jitted apply(x)."""
    int_dim, d_in = w1.shape
    d_out = w2.shape[0]
    assert w2.shape == (d_out, int_dim)
    assert w3.shape == (d_out, d_out)

    w1t, w2t, w3t = _prep_weights(w1, w2, w3)
    two_tc = _has_two_tensorcores()

    @jax.jit
    def apply(x):
        assert x.shape[-1] == d_in
        return _sphere_mlp_call(x, w1t, w2t, w3t, batch_tile, two_tc)

    return apply


def sphere_mlp(x, w1, w2, w3, *, batch_tile=4096):
    """One-shot convenience wrapper (weights prepped eagerly on every call)."""
    return make_sphere_mlp(w1, w2, w3, batch_tile=batch_tile)(x)


# ---------- parameter init (mirrors MPLinear.__init__: unit_norm(randn(out,in))) ----------
def _init_mp_weight(key, out_features, in_features):
    w = jax.random.normal(key, (out_features, in_features), dtype=jnp.float32)
    n = jnp.sqrt(jnp.sum(w * w, axis=-1, keepdims=True))
    return w / (EPS + n)


# ---------- pure-JAX f32 reference for verification ----------
def _reference(x, w1, w2, w3):
    def unit_norm(v):
        n = jnp.sqrt(jnp.sum(v.astype(jnp.float32) ** 2, axis=-1, keepdims=True))
        return v / (EPS + n)

    def rms_norm(v):
        d = v.shape[-1]
        n = jnp.sqrt(jnp.sum(v.astype(jnp.float32) ** 2, axis=-1, keepdims=True))
        return v / (EPS + n / math.sqrt(d))

    def mp_linear(h, w):
        return h @ unit_norm(w).T

    h = rms_norm(x)
    h = jax.nn.silu(mp_linear(h, w1)) / SILU_DIV
    h = jax.nn.silu(mp_linear(h, w2)) / SILU_DIV
    h = mp_linear(h, w3)
    return unit_norm(h)


if __name__ == "__main__":
    key = jax.random.PRNGKey(0)
    k_x, k1, k2, k3 = jax.random.split(key, 4)

    batch = 256
    input_dim = 32
    output_dim = 64
    int_dim = (input_dim + output_dim) // 2  # 48

    x = jax.random.normal(k_x, (batch, input_dim), dtype=jnp.float32)
    w1 = _init_mp_weight(k1, int_dim, input_dim)
    w2 = _init_mp_weight(k2, output_dim, int_dim)
    w3 = _init_mp_weight(k3, output_dim, output_dim)

    mlp = make_sphere_mlp(w1, w2, w3)
    out = jax.block_until_ready(mlp(x))

    ref = _reference(x, w1, w2, w3)
    assert out.shape == (batch, output_dim)
    # bf16 MXU inputs + approx reciprocals / fused rsqrt -> compare with a loosened
    # tolerance against the pure-f32 reference (output is unit-normed, atol dominates).
    max_err = float(jnp.max(jnp.abs(out - ref)))
    assert max_err < 2e-2, f"mismatch vs reference: max abs err {max_err}"

    print("KERNEL_OK")
</pallas_src>

<mosaic_0001>
module attributes {stable_mosaic.version = 11 : i64} {
  func.func @_sphere_mlp_kernel(%arg0: i32, %arg1: memref<256x32xf32, #tpu.memory_space<vmem>>, %arg2: memref<32x48xbf16, #tpu.memory_space<vmem>>, %arg3: memref<48x64xbf16, #tpu.memory_space<vmem>>, %arg4: memref<64x64xbf16, #tpu.memory_space<vmem>>, %arg5: memref<256x64xf32, #tpu.memory_space<vmem>>) attributes {dimension_semantics = [#tpu.dimension_semantics<parallel>], iteration_bounds = array<i64: 1>, scalar_prefetch = 0 : i64, scratch_operands = 0 : i64, tpu.core_type = #tpu.core_type<tc>, window_params = [{transform_indices = @transform_0, window_bounds = array<i64: 256, 32>}, {pipeline_mode = #tpu.pipeline_mode<synchronous>, transform_indices = @transform_1, window_bounds = array<i64: 32, 48>}, {pipeline_mode = #tpu.pipeline_mode<synchronous>, transform_indices = @transform_2, window_bounds = array<i64: 48, 64>}, {pipeline_mode = #tpu.pipeline_mode<synchronous>, transform_indices = @transform_3, window_bounds = array<i64: 64, 64>}, {transform_indices = @transform_4, window_bounds = array<i64: 256, 64>}]} {
    %c0 = arith.constant 0 : index
    %c0_0 = arith.constant 0 : index
    %0 = vector.load %arg1[%c0, %c0_0] : memref<256x32xf32, #tpu.memory_space<vmem>>, vector<256x32xf32>
    %1 = arith.mulf %0, %0 : vector<256x32xf32>
    %cst = arith.constant dense<0.000000e+00> : vector<256xf32>
    %2 = vector.multi_reduction <add>, %1, %cst [1] : vector<256x32xf32> to vector<256xf32>
    %3 = vector.shape_cast %2 : vector<256xf32> to vector<256x1xf32>
    %cst_1 = arith.constant 3.125000e-02 : f32
    %4 = vector.broadcast %cst_1 : f32 to vector<256x1xf32>
    %5 = arith.mulf %3, %4 : vector<256x1xf32>
    %cst_2 = arith.constant 9.99999993E-9 : f32
    %6 = vector.broadcast %cst_2 : f32 to vector<256x1xf32>
    %7 = arith.addf %5, %6 : vector<256x1xf32>
    %8 = math.rsqrt %7 : vector<256x1xf32>
    %9 = vector.broadcast %8 : vector<256x1xf32> to vector<256x32xf32>
    %10 = arith.mulf %0, %9 : vector<256x32xf32>
    %11 = arith.truncf %10 : vector<256x32xf32> to vector<256x32xbf16>
    %c0_3 = arith.constant 0 : index
    %c0_4 = arith.constant 0 : index
    %12 = vector.load %arg2[%c0_3, %c0_4] : memref<32x48xbf16, #tpu.memory_space<vmem>>, vector<32x48xbf16>
    %cst_5 = arith.constant dense<0.000000e+00> : vector<256x48xf32>
    %13 = tpu.matmul %11, %12, %cst_5 {dimension_numbers = #tpu.dot_dimension_numbers<[1], [0], [0], [1], [0, 0, 1, 1], [], []>} : vector<256x32xbf16>, vector<32x48xbf16>, vector<256x48xf32> -> vector<256x48xf32>
    %cst_6 = arith.constant 0.000000e+00 : f32
    %14 = vector.broadcast %cst_6 : f32 to vector<256x48xf32>
    %15 = arith.subf %14, %13 : vector<256x48xf32>
    %16 = math.exp %15 : vector<256x48xf32>
    %cst_7 = arith.constant 1.000000e+00 : f32
    %17 = vector.broadcast %cst_7 : f32 to vector<256x48xf32>
    %18 = arith.addf %17, %16 : vector<256x48xf32>
    %19 = tpu.reciprocal %18 {approx = true} : vector<256x48xf32> -> vector<256x48xf32>
    %20 = arith.mulf %13, %19 : vector<256x48xf32>
    %21 = arith.truncf %20 : vector<256x48xf32> to vector<256x48xbf16>
    %c0_8 = arith.constant 0 : index
    %c0_9 = arith.constant 0 : index
    %22 = vector.load %arg3[%c0_8, %c0_9] : memref<48x64xbf16, #tpu.memory_space<vmem>>, vector<48x64xbf16>
    %cst_10 = arith.constant dense<0.000000e+00> : vector<256x64xf32>
    %23 = tpu.matmul %21, %22, %cst_10 {dimension_numbers = #tpu.dot_dimension_numbers<[1], [0], [0], [1], [0, 0, 1, 1], [], []>} : vector<256x48xbf16>, vector<48x64xbf16>, vector<256x64xf32> -> vector<256x64xf32>
    %cst_11 = arith.constant 0.000000e+00 : f32
    %24 = vector.broadcast %cst_11 : f32 to vector<256x64xf32>
    %25 = arith.subf %24, %23 : vector<256x64xf32>
    %26 = math.exp %25 : vector<256x64xf32>
    %cst_12 = arith.constant 1.000000e+00 : f32
    %27 = vector.broadcast %cst_12 : f32 to vector<256x64xf32>
    %28 = arith.addf %27, %26 : vector<256x64xf32>
    %29 = tpu.reciprocal %28 {approx = true} : vector<256x64xf32> -> vector<256x64xf32>
    %30 = arith.mulf %23, %29 : vector<256x64xf32>
    %31 = arith.truncf %30 : vector<256x64xf32> to vector<256x64xbf16>
    %c0_13 = arith.constant 0 : index
    %c0_14 = arith.constant 0 : index
    %32 = vector.load %arg4[%c0_13, %c0_14] : memref<64x64xbf16, #tpu.memory_space<vmem>>, vector<64x64xbf16>
    %cst_15 = arith.constant dense<0.000000e+00> : vector<256x64xf32>
    %33 = tpu.matmul %31, %32, %cst_15 {dimension_numbers = #tpu.dot_dimension_numbers<[1], [0], [0], [1], [0, 0, 1, 1], [], []>} : vector<256x64xbf16>, vector<64x64xbf16>, vector<256x64xf32> -> vector<256x64xf32>
    %34 = arith.mulf %33, %33 : vector<256x64xf32>
    %cst_16 = arith.constant dense<0.000000e+00> : vector<256xf32>
    %35 = vector.multi_reduction <add>, %34, %cst_16 [1] : vector<256x64xf32> to vector<256xf32>
    %36 = vector.shape_cast %35 : vector<256xf32> to vector<256x1xf32>
    %cst_17 = arith.constant 9.99999993E-9 : f32
    %37 = vector.broadcast %cst_17 : f32 to vector<256x1xf32>
    %38 = arith.addf %36, %37 : vector<256x1xf32>
    %39 = math.rsqrt %38 : vector<256x1xf32>
    %40 = vector.broadcast %39 : vector<256x1xf32> to vector<256x64xf32>
    %41 = arith.mulf %33, %40 : vector<256x64xf32>
    %c0_18 = arith.constant 0 : index
    %c0_19 = arith.constant 0 : index
    %42 = vector.load %arg5[%c0_18, %c0_19] : memref<256x64xf32, #tpu.memory_space<vmem>>, vector<256x64xf32>
    tpu.vector_store %arg5[%c0_18, %c0_19], %41 {strides = array<i32>} : memref<256x64xf32, #tpu.memory_space<vmem>>, vector<256x64xf32>,
    return
  }
  func.func @transform_0(%arg0: i32) -> (i32, i32) {
    %c0_i32 = arith.constant 0 : i32
    %c0_i32_0 = arith.constant 0 : i32
    return %arg0, %c0_i32 : i32, i32
  }
  func.func @transform_1(%arg0: i32) -> (i32, i32) {
    %c0_i32 = arith.constant 0 : i32
    %c0_i32_0 = arith.constant 0 : i32
    %c0_i32_1 = arith.constant 0 : i32
    return %c0_i32, %c0_i32_0 : i32, i32
  }
  func.func @transform_2(%arg0: i32) -> (i32, i32) {
    %c0_i32 = arith.constant 0 : i32
    %c0_i32_0 = arith.constant 0 : i32
    %c0_i32_1 = arith.constant 0 : i32
    return %c0_i32, %c0_i32_0 : i32, i32
  }
  func.func @transform_3(%arg0: i32) -> (i32, i32) {
    %c0_i32 = arith.constant 0 : i32
    %c0_i32_0 = arith.constant 0 : i32
    %c0_i32_1 = arith.constant 0 : i32
    return %c0_i32, %c0_i32_0 : i32, i32
  }
  func.func @transform_4(%arg0: i32) -> (i32, i32) {
    %c0_i32 = arith.constant 0 : i32
    %c0_i32_0 = arith.constant 0 : i32
    return %arg0, %c0_i32 : i32, i32
  }
}

</mosaic_0001>

<llo_original>
// kernel: apply.1
$region0: #{apply.1}
  #allocation0 [shape = 'u32[]', space=smem, size = 0x4, offset = 0x4, fixed_abs, tag = 'smem constant byte address 0x4 - core index']
  #allocation1 [shape = 'u32[144,128]{1,0:T(1,128)}', space=vmem, size = 0x12000, scoped, tag = 'internal scratch']
  %s0 = inlined_call_operand.vmem [shape: f32[256,32], index: 0, kind: input, shape index: {}]
  %s1 = inlined_call_operand.vmem [shape: bf16[32,48], index: 1, kind: input, shape index: {}]
  %s2 = inlined_call_operand.vmem [shape: bf16[48,64], index: 2, kind: input, shape index: {}]
  %s3 = inlined_call_operand.vmem [shape: bf16[64,64], index: 3, kind: input, shape index: {}]
  %s4 = inlined_call_operand.vmem [shape: f32[256,64], index: 4, kind: output, shape index: {}]
  %s5 = sld [smem:[#allocation0]]
  $region26: #{apply.1} parent=0
    _
  %s7 = ssub.s32 1, %s5
  %s8 = scalar_select 0, %s7, %s5
  // Predicated region
  $region2: #{apply.1} parent=0 // pred_check
    _
  $region3: #{apply.1} parent=0 // pred_check_branch
    %10 = sbr.rel (0) target = $region5
  $region4: #{apply.1} parent=0 // pred_region
    _
  $region5: #{apply.1} parent=0 // pred_fallthru
    _
  // Predicated region
  $region6: #{apply.1} parent=0 // pred_check
    _
  $region7: #{apply.1} parent=0 // pred_check_branch
    %12 = sbr.rel (0) target = $region9
  $region8: #{apply.1} parent=0 // pred_region
    _
  $region9: #{apply.1} parent=0 // pred_fallthru
    _
  // Predicated region
  $region10: #{apply.1} parent=0 // pred_check
    _
  $region11: #{apply.1} parent=0 // pred_check_branch
    %14 = sbr.rel (0) target = $region13
  $region12: #{apply.1} parent=0 // pred_region
    _
  $region13: #{apply.1} parent=0 // pred_fallthru
    _
  // Predicated region
  $region14: #{apply.1} parent=0 // pred_check
    _
  $region15: #{apply.1} parent=0 // pred_check_branch
    %16 = sbr.rel (0) target = $region17
  $region16: #{apply.1} parent=0 // pred_region
    _
  $region17: #{apply.1} parent=0 // pred_fallthru
    _
  %v18 = vld [vmem:[%s0] sm:$0xff]
  %v19 = vld [vmem:[%s0 + $0x8] sm:$0xff]
  %v20 = vld [vmem:[%s0 + $0x10] sm:$0xff]
  %v21 = vld [vmem:[%s0 + $0x18] sm:$0xff]
  %v22 = vld [vmem:[%s0 + $0x20] sm:$0xff]
  %v23 = vld [vmem:[%s0 + $0x28] sm:$0xff]
  %v24 = vld [vmem:[%s0 + $0x30] sm:$0xff]
  %v25 = vld [vmem:[%s0 + $0x38] sm:$0xff]
  %v26 = vld [vmem:[%s0 + $0x40] sm:$0xff]
  %v27 = vld [vmem:[%s0 + $0x48] sm:$0xff]
  %v28 = vld [vmem:[%s0 + $0x50] sm:$0xff]
  %v29 = vld [vmem:[%s0 + $0x58] sm:$0xff]
  %v30 = vld [vmem:[%s0 + $0x60] sm:$0xff]
  %v31 = vld [vmem:[%s0 + $0x68] sm:$0xff]
  %v32 = vld [vmem:[%s0 + $0x70] sm:$0xff]
  %v33 = vld [vmem:[%s0 + $0x78] sm:$0xff]
  %v34 = vld [vmem:[%s0 + $0x80] sm:$0xff]
  %v35 = vld [vmem:[%s0 + $0x88] sm:$0xff]
  %v36 = vld [vmem:[%s0 + $0x90] sm:$0xff]
  %v37 = vld [vmem:[%s0 + $0x98] sm:$0xff]
  %v38 = vld [vmem:[%s0 + $0xa0] sm:$0xff]
  %v39 = vld [vmem:[%s0 + $0xa8] sm:$0xff]
  %v40 = vld [vmem:[%s0 + $0xb0] sm:$0xff]
  %v41 = vld [vmem:[%s0 + $0xb8] sm:$0xff]
  %v42 = vld [vmem:[%s0 + $0xc0] sm:$0xff]
  %v43 = vld [vmem:[%s0 + $0xc8] sm:$0xff]
  %v44 = vld [vmem:[%s0 + $0xd0] sm:$0xff]
  %v45 = vld [vmem:[%s0 + $0xd8] sm:$0xff]
  %v46 = vld [vmem:[%s0 + $0xe0] sm:$0xff]
  %v47 = vld [vmem:[%s0 + $0xe8] sm:$0xff]
  %v48 = vld [vmem:[%s0 + $0xf0] sm:$0xff]
  %v49 = vld [vmem:[%s0 + $0xf8] sm:$0xff]
  %v50 = vmul.f32 %v18, %v18
  %v51 = vmul.f32 %v19, %v19
  %v52 = vmul.f32 %v20, %v20
  %v53 = vmul.f32 %v21, %v21
  %v54 = vmul.f32 %v22, %v22
  %v55 = vmul.f32 %v23, %v23
  %v56 = vmul.f32 %v24, %v24
  %v57 = vmul.f32 %v25, %v25
  %v58 = vmul.f32 %v26, %v26
  %v59 = vmul.f32 %v27, %v27
  %v60 = vmul.f32 %v28, %v28
  %v61 = vmul.f32 %v29, %v29
  %v62 = vmul.f32 %v30, %v30
  %v63 = vmul.f32 %v31, %v31
  %v64 = vmul.f32 %v32, %v32
  %v65 = vmul.f32 %v33, %v33
  %v66 = vmul.f32 %v34, %v34
  %v67 = vmul.f32 %v35, %v35
  %v68 = vmul.f32 %v36, %v36
  %v69 = vmul.f32 %v37, %v37
  %v70 = vmul.f32 %v38, %v38
  %v71 = vmul.f32 %v39, %v39
  %v72 = vmul.f32 %v40, %v40
  %v73 = vmul.f32 %v41, %v41
  %v74 = vmul.f32 %v42, %v42
  %v75 = vmul.f32 %v43, %v43
  %v76 = vmul.f32 %v44, %v44
  %v77 = vmul.f32 %v45, %v45
  %v78 = vmul.f32 %v46, %v46
  %v79 = vmul.f32 %v47, %v47
  %v80 = vmul.f32 %v48, %v48
  %v81 = vmul.f32 %v49, %v49
  %vm82 = vcmask 261120
  %v83 = vsel %vm82, %v50, 0.0
  %84 = vadd.xlane.f32.xlu0 %v83
  %v85 = vpop.xlane.xlu0 %84
  %v86 = vsel %vm82, %v51, 0.0
  %87 = vadd.xlane.f32.xlu0 %v86
  %v88 = vpop.xlane.xlu0 %87
  %v89 = vsel %vm82, %v52, 0.0
  %90 = vadd.xlane.f32.xlu0 %v89
  %v91 = vpop.xlane.xlu0 %90
  %v92 = vsel %vm82, %v53, 0.0
  %93 = vadd.xlane.f32.xlu0 %v92
  %v94 = vpop.xlane.xlu0 %93
  %v95 = vsel %vm82, %v54, 0.0
  %96 = vadd.xlane.f32.xlu0 %v95
  %v97 = vpop.xlane.xlu0 %96
  %v98 = vsel %vm82, %v55, 0.0
  %99 = vadd.xlane.f32.xlu0 %v98
  %v100 = vpop.xlane.xlu0 %99
  %v101 = vsel %vm82, %v56, 0.0
  %102 = vadd.xlane.f32.xlu0 %v101
  %v103 = vpop.xlane.xlu0 %102
  %v104 = vsel %vm82, %v57, 0.0
  %105 = vadd.xlane.f32.xlu0 %v104
  %v106 = vpop.xlane.xlu0 %105
  %v107 = vsel %vm82, %v58, 0.0
  %108 = vadd.xlane.f32.xlu0 %v107
  %v109 = vpop.xlane.xlu0 %108
  %v110 = vsel %vm82, %v59, 0.0
  %111 = vadd.xlane.f32.xlu0 %v110
  %v112 = vpop.xlane.xlu0 %111
  %v113 = vsel %vm82, %v60, 0.0
  %114 = vadd.xlane.f32.xlu0 %v113
  %v115 = vpop.xlane.xlu0 %114
  %v116 = vsel %vm82, %v61, 0.0
  %117 = vadd.xlane.f32.xlu0 %v116
  %v118 = vpop.xlane.xlu0 %117
  %v119 = vsel %vm82, %v62, 0.0
  %120 = vadd.xlane.f32.xlu0 %v119
  %v121 = vpop.xlane.xlu0 %120
  %v122 = vsel %vm82, %v63, 0.0
  %123 = vadd.xlane.f32.xlu0 %v122
  %v124 = vpop.xlane.xlu0 %123
  %v125 = vsel %vm82, %v64, 0.0
  %126 = vadd.xlane.f32.xlu0 %v125
  %v127 = vpop.xlane.xlu0 %126
  %v128 = vsel %vm82, %v65, 0.0
  %129 = vadd.xlane.f32.xlu0 %v128
  %v130 = vpop.xlane.xlu0 %129
  %v131 = vsel %vm82, %v66, 0.0
  %132 = vadd.xlane.f32.xlu0 %v131
  %v133 = vpop.xlane.xlu0 %132
  %v134 = vsel %vm82, %v67, 0.0
  %135 = vadd.xlane.f32.xlu0 %v134
  %v136 = vpop.xlane.xlu0 %135
  %v137 = vsel %vm82, %v68, 0.0
  %138 = vadd.xlane.f32.xlu0 %v137
  %v139 = vpop.xlane.xlu0 %138
  %v140 = vsel %vm82, %v69, 0.0
  %141 = vadd.xlane.f32.xlu0 %v140
  %v142 = vpop.xlane.xlu0 %141
  %v143 = vsel %vm82, %v70, 0.0
  %144 = vadd.xlane.f32.xlu0 %v143
  %v145 = vpop.xlane.xlu0 %144
  %v146 = vsel %vm82, %v71, 0.0
  %147 = vadd.xlane.f32.xlu0 %v146
  %v148 = vpop.xlane.xlu0 %147
  %v149 = vsel %vm82, %v72, 0.0
  %150 = vadd.xlane.f32.xlu0 %v149
  %v151 = vpop.xlane.xlu0 %150
  %v152 = vsel %vm82, %v73, 0.0
  %153 = vadd.xlane.f32.xlu0 %v152
  %v154 = vpop.xlane.xlu0 %153
  %v155 = vsel %vm82, %v74, 0.0
  %156 = vadd.xlane.f32.xlu0 %v155
  %v157 = vpop.xlane.xlu0 %156
  %v158 = vsel %vm82, %v75, 0.0
  %159 = vadd.xlane.f32.xlu0 %v158
  %v160 = vpop.xlane.xlu0 %159
  %v161 = vsel %vm82, %v76, 0.0
  %162 = vadd.xlane.f32.xlu0 %v161
  %v163 = vpop.xlane.xlu0 %162
  %v164 = vsel %vm82, %v77, 0.0
  %165 = vadd.xlane.f32.xlu0 %v164
  %v166 = vpop.xlane.xlu0 %165
  %v167 = vsel %vm82, %v78, 0.0
  %168 = vadd.xlane.f32.xlu0 %v167
  %v169 = vpop.xlane.xlu0 %168
  %v170 = vsel %vm82, %v79, 0.0
  %171 = vadd.xlane.f32.xlu0 %v170
  %v172 = vpop.xlane.xlu0 %171
  %v173 = vsel %vm82, %v80, 0.0
  %174 = vadd.xlane.f32.xlu0 %v173
  %v175 = vpop.xlane.xlu0 %174
  %v176 = vsel %vm82, %v81, 0.0
  %177 = vadd.xlane.f32.xlu0 %v176
  %v178 = vpop.xlane.xlu0 %177
  %v179 = vmul.f32 %v85, 0.03125
  %v180 = vmul.f32 %v88, 0.03125
  %v181 = vmul.f32 %v91, 0.03125
  %v182 = vmul.f32 %v94, 0.03125
  %v183 = vmul.f32 %v97, 0.03125
  %v184 = vmul.f32 %v100, 0.03125
  %v185 = vmul.f32 %v103, 0.03125
  %v186 = vmul.f32 %v106, 0.03125
  %v187 = vmul.f32 %v109, 0.03125
  %v188 = vmul.f32 %v112, 0.03125
  %v189 = vmul.f32 %v115, 0.03125
  %v190 = vmul.f32 %v118, 0.03125
  %v191 = vmul.f32 %v121, 0.03125
  %v192 = vmul.f32 %v124, 0.03125
  %v193 = vmul.f32 %v127, 0.03125
  %v194 = vmul.f32 %v130, 0.03125
  %v195 = vmul.f32 %v133, 0.03125
  %v196 = vmul.f32 %v136, 0.03125
  %v197 = vmul.f32 %v139, 0.03125
  %v198 = vmul.f32 %v142, 0.03125
  %v199 = vmul.f32 %v145, 0.03125
  %v200 = vmul.f32 %v148, 0.03125
  %v201 = vmul.f32 %v151, 0.03125
  %v202 = vmul.f32 %v154, 0.03125
  %v203 = vmul.f32 %v157, 0.03125
  %v204 = vmul.f32 %v160, 0.03125
  %v205 = vmul.f32 %v163, 0.03125
  %v206 = vmul.f32 %v166, 0.03125
  %v207 = vmul.f32 %v169, 0.03125
  %v208 = vmul.f32 %v172, 0.03125
  %v209 = vmul.f32 %v175, 0.03125
  %v210 = vmul.f32 %v178, 0.03125
  %v211 = vadd.f32 %v179, 1e-08
  %v212 = vadd.f32 %v180, 1e-08
  %v213 = vadd.f32 %v181, 1e-08
  %v214 = vadd.f32 %v182, 1e-08
  %v215 = vadd.f32 %v183, 1e-08
  %v216 = vadd.f32 %v184, 1e-08
  %v217 = vadd.f32 %v185, 1e-08
  %v218 = vadd.f32 %v186, 1e-08
  %v219 = vadd.f32 %v187, 1e-08
  %v220 = vadd.f32 %v188, 1e-08
  %v221 = vadd.f32 %v189, 1e-08
  %v222 = vadd.f32 %v190, 1e-08
  %v223 = vadd.f32 %v191, 1e-08
  %v224 = vadd.f32 %v192, 1e-08
  %v225 = vadd.f32 %v193, 1e-08
  %v226 = vadd.f32 %v194, 1e-08
  %v227 = vadd.f32 %v195, 1e-08
  %v228 = vadd.f32 %v196, 1e-08
  %v229 = vadd.f32 %v197, 1e-08
  %v230 = vadd.f32 %v198, 1e-08
  %v231 = vadd.f32 %v199, 1e-08
  %v232 = vadd.f32 %v200, 1e-08
  %v233 = vadd.f32 %v201, 1e-08
  %v234 = vadd.f32 %v202, 1e-08
  %v235 = vadd.f32 %v203, 1e-08
  %v236 = vadd.f32 %v204, 1e-08
  %v237 = vadd.f32 %v205, 1e-08
  %v238 = vadd.f32 %v206, 1e-08
  %v239 = vadd.f32 %v207, 1e-08
  %v240 = vadd.f32 %v208, 1e-08
  %v241 = vadd.f32 %v209, 1e-08
  %v242 = vadd.f32 %v210, 1e-08
  %v243 = vrsqrt.pop %v211
  %v244 = vrsqrt.pop %v212
  %v245 = vrsqrt.pop %v213
  %v246 = vrsqrt.pop %v214
  %v247 = vrsqrt.pop %v215
  %v248 = vrsqrt.pop %v216
  %v249 = vrsqrt.pop %v217
  %v250 = vrsqrt.pop %v218
  %v251 = vrsqrt.pop %v219
  %v252 = vrsqrt.pop %v220
  %v253 = vrsqrt.pop %v221
  %v254 = vrsqrt.pop %v222
  %v255 = vrsqrt.pop %v223
  %v256 = vrsqrt.pop %v224
  %v257 = vrsqrt.pop %v225
  %v258 = vrsqrt.pop %v226
  %v259 = vrsqrt.pop %v227
  %v260 = vrsqrt.pop %v228
  %v261 = vrsqrt.pop %v229
  %v262 = vrsqrt.pop %v230
  %v263 = vrsqrt.pop %v231
  %v264 = vrsqrt.pop %v232
  %v265 = vrsqrt.pop %v233
  %v266 = vrsqrt.pop %v234
  %v267 = vrsqrt.pop %v235
  %v268 = vrsqrt.pop %v236
  %v269 = vrsqrt.pop %v237
  %v270 = vrsqrt.pop %v238
  %v271 = vrsqrt.pop %v239
  %v272 = vrsqrt.pop %v240
  %v273 = vrsqrt.pop %v241
  %v274 = vrsqrt.pop %v242
  %v275 = vmul.f32 %v18, %v243
  %v276 = vmul.f32 %v19, %v244
  %v277 = vmul.f32 %v20, %v245
  %v278 = vmul.f32 %v21, %v246
  %v279 = vmul.f32 %v22, %v247
  %v280 = vmul.f32 %v23, %v248
  %v281 = vmul.f32 %v24, %v249
  %v282 = vmul.f32 %v25, %v250
  %v283 = vmul.f32 %v26, %v251
  %v284 = vmul.f32 %v27, %v252
  %v285 = vmul.f32 %v28, %v253
  %v286 = vmul.f32 %v29, %v254
  %v287 = vmul.f32 %v30, %v255
  %v288 = vmul.f32 %v31, %v256
  %v289 = vmul.f32 %v32, %v257
  %v290 = vmul.f32 %v33, %v258
  %v291 = vmul.f32 %v34, %v259
  %v292 = vmul.f32 %v35, %v260
  %v293 = vmul.f32 %v36, %v261
  %v294 = vmul.f32 %v37, %v262
  %v295 = vmul.f32 %v38, %v263
  %v296 = vmul.f32 %v39, %v264
  %v297 = vmul.f32 %v40, %v265
  %v298 = vmul.f32 %v41, %v266
  %v299 = vmul.f32 %v42, %v267
  %v300 = vmul.f32 %v43, %v268
  %v301 = vmul.f32 %v44, %v269
  %v302 = vmul.f32 %v45, %v270
  %v303 = vmul.f32 %v46, %v271
  %v304 = vmul.f32 %v47, %v272
  %v305 = vmul.f32 %v48, %v273
  %v306 = vmul.f32 %v49, %v274
  %v307 = vpack.c.bf16 %v276, %v275
  %v308 = vpack.c.bf16 %v278, %v277
  %v309 = vpack.c.bf16 %v280, %v279
  %v310 = vpack.c.bf16 %v282, %v281
  %v311 = vpack.c.bf16 %v284, %v283
  %v312 = vpack.c.bf16 %v286, %v285
  %v313 = vpack.c.bf16 %v288, %v287
  %v314 = vpack.c.bf16 %v290, %v289
  %v315 = vpack.c.bf16 %v292, %v291
  %v316 = vpack.c.bf16 %v294, %v293
  %v317 = vpack.c.bf16 %v296, %v295
  %v318 = vpack.c.bf16 %v298, %v297
  %v319 = vpack.c.bf16 %v300, %v299
  %v320 = vpack.c.bf16 %v302, %v301
  %v321 = vpack.c.bf16 %v304, %v303
  %v322 = vpack.c.bf16 %v306, %v305
  %v323 = vld [vmem:[%s1] sm:$0xf]
  %v324 = vld [vmem:[%s1 + $0x4] sm:$0xf]
  %v325 = vld [vmem:[%s1 + $0x8] sm:$0xf]
  %v326 = vld [vmem:[%s1 + $0xc] sm:$0xf]
  %v331 = vunpack.c.l.b16 %v323
  %v332 = vunpack.c.l.b16 %v324
  %v333 = vunpack.c.l.b16 %v325
  %v334 = vunpack.c.l.b16 %v326
  %v335 = vpack.c.b16 %v332, %v331
  %v336 = vpack.c.b16 %v334, %v333
  %v340 = vsel %vm82, %v307, 0
  %v343 = vsel %vm82, %v308, 0
  %v346 = vsel %vm82, %v309, 0
  %v349 = vsel %vm82, %v310, 0
  %v352 = vsel %vm82, %v311, 0
  %v355 = vsel %vm82, %v312, 0
  %v358 = vsel %vm82, %v313, 0
  %v361 = vsel %vm82, %v314, 0
  %v364 = vsel %vm82, %v315, 0
  %v367 = vsel %vm82, %v316, 0
  %v370 = vsel %vm82, %v317, 0
  %v373 = vsel %vm82, %v318, 0
  %v376 = vsel %vm82, %v319, 0
  %v379 = vsel %vm82, %v320, 0
  %v382 = vsel %vm82, %v321, 0
  %v385 = vsel %vm82, %v322, 0
  %387 = vmatprep.subr.bf16.mxu0 0
  %388 = vmatpush1.bf16.msra.mxu0 %v335
  %389 = vmatprep.subr.bf16.mxu0 0
  %390 = vmatpush1.bf16.msra.mxu0 %v336
  %391 = vmatprep.subr.bf16.mxu0 0
  %392 = vmatpush1.bf16.msra.mxu0 0
  %393 = vmatprep.subr.bf16.mxu0 0
  %394 = vmatpush1.bf16.msra.mxu0 0
  %395 = vmatprep.subr.bf16.mxu0 0
  %396 = vmatpush1.bf16.msra.mxu0 0
  %397 = vmatprep.subr.bf16.mxu0 0
  %398 = vmatpush1.bf16.msra.mxu0 0
  %399 = vmatprep.subr.bf16.mxu0 0
  %400 = vmatpush1.bf16.msra.mxu0 0
  %401 = vmatprep.subr.bf16.mxu0 0
  %402 = vmatpush1.bf16.msra.mxu0 0
  %403 = vmatprep.subr.bf16.mxu0 0
  %404 = vmatpush1.bf16.msra.mxu0 0
  %405 = vmatprep.subr.bf16.mxu0 0
  %406 = vmatpush1.bf16.msra.mxu0 0
  %407 = vmatprep.subr.bf16.mxu0 0
  %408 = vmatpush1.bf16.msra.mxu0 0
  %409 = vmatprep.subr.bf16.mxu0 0
  %410 = vmatpush1.bf16.msra.mxu0 0
  %411 = vmatprep.subr.bf16.mxu0 0
  %412 = vmatpush1.bf16.msra.mxu0 0
  %413 = vmatprep.subr.bf16.mxu0 0
  %414 = vmatpush1.bf16.msra.mxu0 0
  %415 = vmatprep.subr.bf16.mxu0 0
  %416 = vmatpush1.bf16.msra.mxu0 0
  %417 = vmatprep.subr.bf16.mxu0 0
  %418 = vmatpush1.bf16.msra.mxu0 0
  %419 = vmatprep.mubr.bf16.mxu0 0
  %420 = vmatmul.mubr.bf16.gmra.mrb[0].mxu0 %v340
  %v421 = vpop.f32.mrb[0].mxu0
  %v422 = vadd.f32 0.0, %v421
  %v423 = vpop.f32.mrb[0].mxu0
  %v424 = vpop.f32.mrb[0].mxu0
  %v425 = vadd.f32 0.0, %v424
  %v426 = vpop.f32.mrb[0].mxu0
  %427 = vmatprep.mubr.bf16.mxu0 0
  %428 = vmatmul.mubr.bf16.gmra.mrb[0].mxu0 %v343
  %v429 = vpop.f32.mrb[0].mxu0
  %v430 = vadd.f32 0.0, %v429
  %v431 = vpop.f32.mrb[0].mxu0
  %v432 = vpop.f32.mrb[0].mxu0
  %v433 = vadd.f32 0.0, %v432
  %v434 = vpop.f32.mrb[0].mxu0
  %435 = vmatprep.mubr.bf16.mxu0 0
  %436 = vmatmul.mubr.bf16.gmra.mrb[0].mxu0 %v346
  %v437 = vpop.f32.mrb[0].mxu0
  %v438 = vadd.f32 0.0, %v437
  %v439 = vpop.f32.mrb[0].mxu0
  %v440 = vpop.f32.mrb[0].mxu0
  %v441 = vadd.f32 0.0, %v440
  %v442 = vpop.f32.mrb[0].mxu0
  %443 = vmatprep.mubr.bf16.mxu0 0
  %444 = vmatmul.mubr.bf16.gmra.mrb[0].mxu0 %v349
  %v445 = vpop.f32.mrb[0].mxu0
  %v446 = vadd.f32 0.0, %v445
  %v447 = vpop.f32.mrb[0].mxu0
  %v448 = vpop.f32.mrb[0].mxu0
  %v449 = vadd.f32 0.0, %v448
  %v450 = vpop.f32.mrb[0].mxu0
  %451 = vmatprep.mubr.bf16.mxu0 0
  %452 = vmatmul.mubr.bf16.gmra.mrb[0].mxu0 %v352
  %v453 = vpop.f32.mrb[0].mxu0
  %v454 = vadd.f32 0.0, %v453
  %v455 = vpop.f32.mrb[0].mxu0
  %v456 = vpop.f32.mrb[0].mxu0
  %v457 = vadd.f32 0.0, %v456
  %v458 = vpop.f32.mrb[0].mxu0
  %459 = vmatprep.mubr.bf16.mxu0 0
  %460 = vmatmul.mubr.bf16.gmra.mrb[0].mxu0 %v355
  %v461 = vpop.f32.mrb[0].mxu0
  %v462 = vadd.f32 0.0, %v461
  %v463 = vpop.f32.mrb[0].mxu0
  %v464 = vpop.f32.mrb[0].mxu0
  %v465 = vadd.f32 0.0, %v464
  %v466 = vpop.f32.mrb[0].mxu0
  %467 = vmatprep.mubr.bf16.mxu0 0
  %468 = vmatmul.mubr.bf16.gmra.mrb[0].mxu0 %v358
  %v469 = vpop.f32.mrb[0].mxu0
  %v470 = vadd.f32 0.0, %v469
  %v471 = vpop.f32.mrb[0].mxu0
  %v472 = vpop.f32.mrb[0].mxu0
  %v473 = vadd.f32 0.0, %v472
  %v474 = vpop.f32.mrb[0].mxu0
  %475 = vmatprep.mubr.bf16.mxu0 0
  %476 = vmatmul.mubr.bf16.gmra.mrb[0].mxu0 %v361
  %v477 = vpop.f32.mrb[0].mxu0
  %v478 = vadd.f32 0.0, %v477
  %v479 = vpop.f32.mrb[0].mxu0
  %v480 = vpop.f32.mrb[0].mxu0
  %v481 = vadd.f32 0.0, %v480
  %v482 = vpop.f32.mrb[0].mxu0
  %483 = vmatprep.mubr.bf16.mxu0 0
  %484 = vmatmul.mubr.bf16.gmra.mrb[0].mxu0 %v364
  %v485 = vpop.f32.mrb[0].mxu0
  %v486 = vadd.f32 0.0, %v485
  %v487 = vpop.f32.mrb[0].mxu0
  %v488 = vpop.f32.mrb[0].mxu0
  %v489 = vadd.f32 0.0, %v488
  %v490 = vpop.f32.mrb[0].mxu0
  %491 = vmatprep.mubr.bf16.mxu0 0
  %492 = vmatmul.mubr.bf16.gmra.mrb[0].mxu0 %v367
  %v493 = vpop.f32.mrb[0].mxu0
  %v494 = vadd.f32 0.0, %v493
  %v495 = vpop.f32.mrb[0].mxu0
  %v496 = vpop.f32.mrb[0].mxu0
  %v497 = vadd.f32 0.0, %v496
  %v498 = vpop.f32.mrb[0].mxu0
  %499 = vmatprep.mubr.bf16.mxu0 0
  %500 = vmatmul.mubr.bf16.gmra.mrb[0].mxu0 %v370
  %v501 = vpop.f32.mrb[0].mxu0
  %v502 = vadd.f32 0.0, %v501
  %v503 = vpop.f32.mrb[0].mxu0
  %v504 = vpop.f32.mrb[0].mxu0
  %v505 = vadd.f32 0.0, %v504
  %v506 = vpop.f32.mrb[0].mxu0
  %507 = vmatprep.mubr.bf16.mxu0 0
  %508 = vmatmul.mubr.bf16.gmra.mrb[0].mxu0 %v373
  %v509 = vpop.f32.mrb[0].mxu0
  %v510 = vadd.f32 0.0, %v509
  %v511 = vpop.f32.mrb[0].mxu0
  %v512 = vpop.f32.mrb[0].mxu0
  %v513 = vadd.f32 0.0, %v512
  %v514 = vpop.f32.mrb[0].mxu0
  %515 = vmatprep.mubr.bf16.mxu0 0
  %516 = vmatmul.mubr.bf16.gmra.mrb[0].mxu0 %v376
  %v517 = vpop.f32.mrb[0].mxu0
  %v518 = vadd.f32 0.0, %v517
  %v519 = vpop.f32.mrb[0].mxu0
  %v520 = vpop.f32.mrb[0].mxu0
  %v521 = vadd.f32 0.0, %v520
  %v522 = vpop.f32.mrb[0].mxu0
  %523 = vmatprep.mubr.bf16.mxu0 0
  %524 = vmatmul.mubr.bf16.gmra.mrb[0].mxu0 %v379
  %v525 = vpop.f32.mrb[0].mxu0
  %v526 = vadd.f32 0.0, %v525
  %v527 = vpop.f32.mrb[0].mxu0
  %v528 = vpop.f32.mrb[0].mxu0
  %v529 = vadd.f32 0.0, %v528
  %v530 = vpop.f32.mrb[0].mxu0
  %531 = vmatprep.mubr.bf16.mxu0 0
  %532 = vmatmul.mubr.bf16.gmra.mrb[0].mxu0 %v382
  %v533 = vpop.f32.mrb[0].mxu0
  %v534 = vadd.f32 0.0, %v533
  %v535 = vpop.f32.mrb[0].mxu0
  %v536 = vpop.f32.mrb[0].mxu0
  %v537 = vadd.f32 0.0, %v536
  %v538 = vpop.f32.mrb[0].mxu0
  %539 = vmatprep.mubr.bf16.mxu0 0
  %540 = vmatmul.mubr.bf16.gmra.mrb[0].mxu0 %v385
  %v541 = vpop.f32.mrb[0].mxu0
  %v542 = vadd.f32 0.0, %v541
  %v543 = vpop.f32.mrb[0].mxu0
  %v544 = vpop.f32.mrb[0].mxu0
  %v545 = vadd.f32 0.0, %v544
  %v546 = vpop.f32.mrb[0].mxu0
  %547 = vdwg.mxu0
  %v548 = vsub.f32 0.0, %v422
  %v549 = vsub.f32 0.0, %v425
  %v550 = vsub.f32 0.0, %v430
  %v551 = vsub.f32 0.0, %v433
  %v552 = vsub.f32 0.0, %v438
  %v553 = vsub.f32 0.0, %v441
  %v554 = vsub.f32 0.0, %v446
  %v555 = vsub.f32 0.0, %v449
  %v556 = vsub.f32 0.0, %v454
  %v557 = vsub.f32 0.0, %v457
  %v558 = vsub.f32 0.0, %v462
  %v559 = vsub.f32 0.0, %v465
  %v560 = vsub.f32 0.0, %v470
  %v561 = vsub.f32 0.0, %v473
  %v562 = vsub.f32 0.0, %v478
  %v563 = vsub.f32 0.0, %v481
  %v564 = vsub.f32 0.0, %v486
  %v565 = vsub.f32 0.0, %v489
  %v566 = vsub.f32 0.0, %v494
  %v567 = vsub.f32 0.0, %v497
  %v568 = vsub.f32 0.0, %v502
  %v569 = vsub.f32 0.0, %v505
  %v570 = vsub.f32 0.0, %v510
  %v571 = vsub.f32 0.0, %v513
  %v572 = vsub.f32 0.0, %v518
  %v573 = vsub.f32 0.0, %v521
  %v574 = vsub.f32 0.0, %v526
  %v575 = vsub.f32 0.0, %v529
  %v576 = vsub.f32 0.0, %v534
  %v577 = vsub.f32 0.0, %v537
  %v578 = vsub.f32 0.0, %v542
  %v579 = vsub.f32 0.0, %v545
  %v580 = vmul.f32 %v548, 1.442695
  %v581 = vpow.pop %v580
  %v582 = vmul.f32 %v549, 1.442695
  %v583 = vpow.pop %v582
  %v584 = vmul.f32 %v550, 1.442695
  %v585 = vpow.pop %v584
  %v586 = vmul.f32 %v551, 1.442695
  %v587 = vpow.pop %v586
  %v588 = vmul.f32 %v552, 1.442695
  %v589 = vpow.pop %v588
  %v590 = vmul.f32 %v553, 1.442695
  %v591 = vpow.pop %v590
  %v592 = vmul.f32 %v554, 1.442695
  %v593 = vpow.pop %v592
  %v594 = vmul.f32 %v555, 1.442695
  %v595 = vpow.pop %v594
  %v596 = vmul.f32 %v556, 1.442695
  %v597 = vpow.pop %v596
  %v598 = vmul.f32 %v557, 1.442695
  %v599 = vpow.pop %v598
  %v600 = vmul.f32 %v558, 1.442695
  %v601 = vpow.pop %v600
  %v602 = vmul.f32 %v559, 1.442695
  %v603 = vpow.pop %v602
  %v604 = vmul.f32 %v560, 1.442695
  %v605 = vpow.pop %v604
  %v606 = vmul.f32 %v561, 1.442695
  %v607 = vpow.pop %v606
  %v608 = vmul.f32 %v562, 1.442695
  %v609 = vpow.pop %v608
  %v610 = vmul.f32 %v563, 1.442695
  %v611 = vpow.pop %v610
  %v612 = vmul.f32 %v564, 1.442695
  %v613 = vpow.pop %v612
  %v614 = vmul.f32 %v565, 1.442695
  %v615 = vpow.pop %v614
  %v616 = vmul.f32 %v566, 1.442695
  %v617 = vpow.pop %v616
  %v618 = vmul.f32 %v567, 1.442695
  %v619 = vpow.pop %v618
  %v620 = vmul.f32 %v568, 1.442695
  %v621 = vpow.pop %v620
  %v622 = vmul.f32 %v569, 1.442695
  %v623 = vpow.pop %v622
  %v624 = vmul.f32 %v570, 1.442695
  %v625 = vpow.pop %v624
  %v626 = vmul.f32 %v571, 1.442695
  %v627 = vpow.pop %v626
  %v628 = vmul.f32 %v572, 1.442695
  %v629 = vpow.pop %v628
  %v630 = vmul.f32 %v573, 1.442695
  %v631 = vpow.pop %v630
  %v632 = vmul.f32 %v574, 1.442695
  %v633 = vpow.pop %v632
  %v634 = vmul.f32 %v575, 1.442695
  %v635 = vpow.pop %v634
  %v636 = vmul.f32 %v576, 1.442695
  %v637 = vpow.pop %v636
  %v638 = vmul.f32 %v577, 1.442695
  %v639 = vpow.pop %v638
  %v640 = vmul.f32 %v578, 1.442695
  %v641 = vpow.pop %v640
  %v642 = vmul.f32 %v579, 1.442695
  %v643 = vpow.pop %v642
  %v644 = vadd.f32 %v581, 1.0
  %v645 = vadd.f32 %v583, 1.0
  %v646 = vadd.f32 %v585, 1.0
  %v647 = vadd.f32 %v587, 1.0
  %v648 = vadd.f32 %v589, 1.0
  %v649 = vadd.f32 %v591, 1.0
  %v650 = vadd.f32 %v593, 1.0
  %v651 = vadd.f32 %v595, 1.0
  %v652 = vadd.f32 %v597, 1.0
  %v653 = vadd.f32 %v599, 1.0
  %v654 = vadd.f32 %v601, 1.0
  %v655 = vadd.f32 %v603, 1.0
  %v656 = vadd.f32 %v605, 1.0
  %v657 = vadd.f32 %v607, 1.0
  %v658 = vadd.f32 %v609, 1.0
  %v659 = vadd.f32 %v611, 1.0
  %v660 = vadd.f32 %v613, 1.0
  %v661 = vadd.f32 %v615, 1.0
  %v662 = vadd.f32 %v617, 1.0
  %v663 = vadd.f32 %v619, 1.0
  %v664 = vadd.f32 %v621, 1.0
  %v665 = vadd.f32 %v623, 1.0
  %v666 = vadd.f32 %v625, 1.0
  %v667 = vadd.f32 %v627, 1.0
  %v668 = vadd.f32 %v629, 1.0
  %v669 = vadd.f32 %v631, 1.0
  %v670 = vadd.f32 %v633, 1.0
  %v671 = vadd.f32 %v635, 1.0
  %v672 = vadd.f32 %v637, 1.0
  %v673 = vadd.f32 %v639, 1.0
  %v674 = vadd.f32 %v641, 1.0
  %v675 = vadd.f32 %v643, 1.0
  %v676 = vrcp.pop %v644
  %v677 = vrcp.pop %v645
  %v678 = vrcp.pop %v646
  %v679 = vrcp.pop %v647
  %v680 = vrcp.pop %v648
  %v681 = vrcp.pop %v649
  %v682 = vrcp.pop %v650
  %v683 = vrcp.pop %v651
  %v684 = vrcp.pop %v652
  %v685 = vrcp.pop %v653
  %v686 = vrcp.pop %v654
  %v687 = vrcp.pop %v655
  %v688 = vrcp.pop %v656
  %v689 = vrcp.pop %v657
  %v690 = vrcp.pop %v658
  %v691 = vrcp.pop %v659
  %v692 = vrcp.pop %v660
  %v693 = vrcp.pop %v661
  %v694 = vrcp.pop %v662
  %v695 = vrcp.pop %v663
  %v696 = vrcp.pop %v664
  %v697 = vrcp.pop %v665
  %v698 = vrcp.pop %v666
  %v699 = vrcp.pop %v667
  %v700 = vrcp.pop %v668
  %v701 = vrcp.pop %v669
  %v702 = vrcp.pop %v670
  %v703 = vrcp.pop %v671
  %v704 = vrcp.pop %v672
  %v705 = vrcp.pop %v673
  %v706 = vrcp.pop %v674
  %v707 = vrcp.pop %v675
  %v708 = vmul.f32 %v422, %v676
  %v709 = vmul.f32 %v425, %v677
  %v710 = vmul.f32 %v430, %v678
  %v711 = vmul.f32 %v433, %v679
  %v712 = vmul.f32 %v438, %v680
  %v713 = vmul.f32 %v441, %v681
  %v714 = vmul.f32 %v446, %v682
  %v715 = vmul.f32 %v449, %v683
  %v716 = vmul.f32 %v454, %v684
  %v717 = vmul.f32 %v457, %v685
  %v718 = vmul.f32 %v462, %v686
  %v719 = vmul.f32 %v465, %v687
  %v720 = vmul.f32 %v470, %v688
  %v721 = vmul.f32 %v473, %v689
  %v722 = vmul.f32 %v478, %v690
  %v723 = vmul.f32 %v481, %v691
  %v724 = vmul.f32 %v486, %v692
  %v725 = vmul.f32 %v489, %v693
  %v726 = vmul.f32 %v494, %v694
  %v727 = vmul.f32 %v497, %v695
  %v728 = vmul.f32 %v502, %v696
  %v729 = vmul.f32 %v505, %v697
  %v730 = vmul.f32 %v510, %v698
  %v731 = vmul.f32 %v513, %v699
  %v732 = vmul.f32 %v518, %v700
  %v733 = vmul.f32 %v521, %v701
  %v734 = vmul.f32 %v526, %v702
  %v735 = vmul.f32 %v529, %v703
  %v736 = vmul.f32 %v534, %v704
  %v737 = vmul.f32 %v537, %v705
  %v738 = vmul.f32 %v542, %v706
  %v739 = vmul.f32 %v545, %v707
  %v740 = vpack.c.bf16 %v709, %v708
  %v741 = vpack.c.bf16 %v711, %v710
  %v742 = vpack.c.bf16 %v713, %v712
  %v743 = vpack.c.bf16 %v715, %v714
  %v744 = vpack.c.bf16 %v717, %v716
  %v745 = vpack.c.bf16 %v719, %v718
  %v746 = vpack.c.bf16 %v721, %v720
  %v747 = vpack.c.bf16 %v723, %v722
  %v748 = vpack.c.bf16 %v725, %v724
  %v749 = vpack.c.bf16 %v727, %v726
  %v750 = vpack.c.bf16 %v729, %v728
  %v751 = vpack.c.bf16 %v731, %v730
  %v752 = vpack.c.bf16 %v733, %v732
  %v753 = vpack.c.bf16 %v735, %v734
  %v754 = vpack.c.bf16 %v737, %v736
  %v755 = vpack.c.bf16 %v739, %v738
  %v756 = vld [vmem:[%s2] sm:$0xf]
  %v757 = vld [vmem:[%s2 + $0x4] sm:$0xf]
  %v758 = vld [vmem:[%s2 + $0x8] sm:$0xf]
  %v759 = vld [vmem:[%s2 + $0xc] sm:$0xf]
  %v760 = vld [vmem:[%s2 + $0x10] sm:$0xf]
  %v761 = vld [vmem:[%s2 + $0x14] sm:$0xf]
  %v768 = vunpack.c.l.b16 %v756
  %v769 = vunpack.c.l.b16 %v757
  %v770 = vunpack.c.l.b16 %v758
  %v771 = vunpack.c.l.b16 %v759
  %v772 = vunpack.c.l.b16 %v760
  %v773 = vunpack.c.l.b16 %v761
  %v774 = vpack.c.b16 %v769, %v768
  %v775 = vpack.c.b16 %v771, %v770
  %v776 = vpack.c.b16 %v773, %v772
  %vm780 = vcmask 392192
  %v782 = vsel %vm780, %v740, 0
  %v785 = vsel %vm780, %v741, 0
  %v788 = vsel %vm780, %v742, 0
  %v791 = vsel %vm780, %v743, 0
  %v794 = vsel %vm780, %v744, 0
  %v797 = vsel %vm780, %v745, 0
  %v800 = vsel %vm780, %v746, 0
  %v803 = vsel %vm780, %v747, 0
  %v806 = vsel %vm780, %v748, 0
  %v809 = vsel %vm780, %v749, 0
  %v812 = vsel %vm780, %v750, 0
  %v815 = vsel %vm780, %v751, 0
  %v818 = vsel %vm780, %v752, 0
  %v821 = vsel %vm780, %v753, 0
  %v824 = vsel %vm780, %v754, 0
  %v827 = vsel %vm780, %v755, 0
  %829 = vmatprep.subr.bf16.mxu0 0
  %830 = vmatpush1.bf16.msra.mxu0 %v774
  %831 = vmatprep.subr.bf16.mxu0 0
  %832 = vmatpush1.bf16.msra.mxu0 %v775
  %833 = vmatprep.subr.bf16.mxu0 0
  %834 = vmatpush1.bf16.msra.mxu0 %v776
  %835 = vmatprep.subr.bf16.mxu0 0
  %836 = vmatpush1.bf16.msra.mxu0 0
  %837 = vmatprep.subr.bf16.mxu0 0
  %838 = vmatpush1.bf16.msra.mxu0 0
  %839 = vmatprep.subr.bf16.mxu0 0
  %840 = vmatpush1.bf16.msra.mxu0 0
  %841 = vmatprep.subr.bf16.mxu0 0
  %842 = vmatpush1.bf16.msra.mxu0 0
  %843 = vmatprep.subr.bf16.mxu0 0
  %844 = vmatpush1.bf16.msra.mxu0 0
  %845 = vmatprep.subr.bf16.mxu0 0
  %846 = vmatpush1.bf16.msra.mxu0 0
  %847 = vmatprep.subr.bf16.mxu0 0
  %848 = vmatpush1.bf16.msra.mxu0 0
  %849 = vmatprep.subr.bf16.mxu0 0
  %850 = vmatpush1.bf16.msra.mxu0 0
  %851 = vmatprep.subr.bf16.mxu0 0
  %852 = vmatpush1.bf16.msra.mxu0 0
  %853 = vmatprep.subr.bf16.mxu0 0
  %854 = vmatpush1.bf16.msra.mxu0 0
  %855 = vmatprep.subr.bf16.mxu0 0
  %856 = vmatpush1.bf16.msra.mxu0 0
  %857 = vmatprep.subr.bf16.mxu0 0
  %858 = vmatpush1.bf16.msra.mxu0 0
  %859 = vmatprep.subr.bf16.mxu0 0
  %860 = vmatpush1.bf16.msra.mxu0 0
  %861 = vmatprep.mubr.bf16.mxu0 0
  %862 = vmatmul.mubr.bf16.gmra.mrb[0].mxu0 %v782
  %v863 = vpop.f32.mrb[0].mxu0
  %v864 = vadd.f32 0.0, %v863
  %v865 = vpop.f32.mrb[0].mxu0
  %v866 = vpop.f32.mrb[0].mxu0
  %v867 = vadd.f32 0.0, %v866
  %v868 = vpop.f32.mrb[0].mxu0
  %869 = vmatprep.mubr.bf16.mxu0 0
  %870 = vmatmul.mubr.bf16.gmra.mrb[0].mxu0 %v785
  %v871 = vpop.f32.mrb[0].mxu0
  %v872 = vadd.f32 0.0, %v871
  %v873 = vpop.f32.mrb[0].mxu0
  %v874 = vpop.f32.mrb[0].mxu0
  %v875 = vadd.f32 0.0, %v874
  %v876 = vpop.f32.mrb[0].mxu0
  %877 = vmatprep.mubr.bf16.mxu0 0
  %878 = vmatmul.mubr.bf16.gmra.mrb[0].mxu0 %v788
  %v879 = vpop.f32.mrb[0].mxu0
  %v880 = vadd.f32 0.0, %v879
  %v881 = vpop.f32.mrb[0].mxu0
  %v882 = vpop.f32.mrb[0].mxu0
  %v883 = vadd.f32 0.0, %v882
  %v884 = vpop.f32.mrb[0].mxu0
  %885 = vmatprep.mubr.bf16.mxu0 0
  %886 = vmatmul.mubr.bf16.gmra.mrb[0].mxu0 %v791
  %v887 = vpop.f32.mrb[0].mxu0
  %v888 = vadd.f32 0.0, %v887
  %v889 = vpop.f32.mrb[0].mxu0
  %v890 = vpop.f32.mrb[0].mxu0
  %v891 = vadd.f32 0.0, %v890
  %v892 = vpop.f32.mrb[0].mxu0
  %893 = vmatprep.mubr.bf16.mxu0 0
  %894 = vmatmul.mubr.bf16.gmra.mrb[0].mxu0 %v794
  %v895 = vpop.f32.mrb[0].mxu0
  %v896 = vadd.f32 0.0, %v895
  %v897 = vpop.f32.mrb[0].mxu0
  %v898 = vpop.f32.mrb[0].mxu0
  %v899 = vadd.f32 0.0, %v898
  %v900 = vpop.f32.mrb[0].mxu0
  %901 = vmatprep.mubr.bf16.mxu0 0
  %902 = vmatmul.mubr.bf16.gmra.mrb[0].mxu0 %v797
  %v903 = vpop.f32.mrb[0].mxu0
  %v904 = vadd.f32 0.0, %v903
  %v905 = vpop.f32.mrb[0].mxu0
  %v906 = vpop.f32.mrb[0].mxu0
  %v907 = vadd.f32 0.0, %v906
  %v908 = vpop.f32.mrb[0].mxu0
  %909 = vmatprep.mubr.bf16.mxu0 0
  %910 = vmatmul.mubr.bf16.gmra.mrb[0].mxu0 %v800
  %v911 = vpop.f32.mrb[0].mxu0
  %v912 = vadd.f32 0.0, %v911
  %v913 = vpop.f32.mrb[0].mxu0
  %v914 = vpop.f32.mrb[0].mxu0
  %v915 = vadd.f32 0.0, %v914
  %v916 = vpop.f32.mrb[0].mxu0
  %917 = vmatprep.mubr.bf16.mxu0 0
  %918 = vmatmul.mubr.bf16.gmra.mrb[0].mxu0 %v803
  %v919 = vpop.f32.mrb[0].mxu0
  %v920 = vadd.f32 0.0, %v919
  %v921 = vpop.f32.mrb[0].mxu0
  %v922 = vpop.f32.mrb[0].mxu0
  %v923 = vadd.f32 0.0, %v922
  %v924 = vpop.f32.mrb[0].mxu0
  %925 = vmatprep.mubr.bf16.mxu0 0
  %926 = vmatmul.mubr.bf16.gmra.mrb[0].mxu0 %v806
  %v927 = vpop.f32.mrb[0].mxu0
  %v928 = vadd.f32 0.0, %v927
  %v929 = vpop.f32.mrb[0].mxu0
  %v930 = vpop.f32.mrb[0].mxu0
  %v931 = vadd.f32 0.0, %v930
  %v932 = vpop.f32.mrb[0].mxu0
  %933 = vmatprep.mubr.bf16.mxu0 0
  %934 = vmatmul.mubr.bf16.gmra.mrb[0].mxu0 %v809
  %v935 = vpop.f32.mrb[0].mxu0
  %v936 = vadd.f32 0.0, %v935
  %v937 = vpop.f32.mrb[0].mxu0
  %v938 = vpop.f32.mrb[0].mxu0
  %v939 = vadd.f32 0.0, %v938
  %v940 = vpop.f32.mrb[0].mxu0
  %941 = vmatprep.mubr.bf16.mxu0 0
  %942 = vmatmul.mubr.bf16.gmra.mrb[0].mxu0 %v812
  %v943 = vpop.f32.mrb[0].mxu0
  %v944 = vadd.f32 0.0, %v943
  %v945 = vpop.f32.mrb[0].mxu0
  %v946 = vpop.f32.mrb[0].mxu0
  %v947 = vadd.f32 0.0, %v946
  %v948 = vpop.f32.mrb[0].mxu0
  %949 = vmatprep.mubr.bf16.mxu0 0
  %950 = vmatmul.mubr.bf16.gmra.mrb[0].mxu0 %v815
  %v951 = vpop.f32.mrb[0].mxu0
  %v952 = vadd.f32 0.0, %v951
  %v953 = vpop.f32.mrb[0].mxu0
  %v954 = vpop.f32.mrb[0].mxu0
  %v955 = vadd.f32 0.0, %v954
  %v956 = vpop.f32.mrb[0].mxu0
  %957 = vmatprep.mubr.bf16.mxu0 0
  %958 = vmatmul.mubr.bf16.gmra.mrb[0].mxu0 %v818
  %v959 = vpop.f32.mrb[0].mxu0
  %v960 = vadd.f32 0.0, %v959
  %v961 = vpop.f32.mrb[0].mxu0
  %v962 = vpop.f32.mrb[0].mxu0
  %v963 = vadd.f32 0.0, %v962
  %v964 = vpop.f32.mrb[0].mxu0
  %965 = vmatprep.mubr.bf16.mxu0 0
  %966 = vmatmul.mubr.bf16.gmra.mrb[0].mxu0 %v821
  %v967 = vpop.f32.mrb[0].mxu0
  %v968 = vadd.f32 0.0, %v967
  %v969 = vpop.f32.mrb[0].mxu0
  %v970 = vpop.f32.mrb[0].mxu0
  %v971 = vadd.f32 0.0, %v970
  %v972 = vpop.f32.mrb[0].mxu0
  %973 = vmatprep.mubr.bf16.mxu0 0
  %974 = vmatmul.mubr.bf16.gmra.mrb[0].mxu0 %v824
  %v975 = vpop.f32.mrb[0].mxu0
  %v976 = vadd.f32 0.0, %v975
  %v977 = vpop.f32.mrb[0].mxu0
  %v978 = vpop.f32.mrb[0].mxu0
  %v979 = vadd.f32 0.0, %v978
  %v980 = vpop.f32.mrb[0].mxu0
  %981 = vmatprep.mubr.bf16.mxu0 0
  %982 = vmatmul.mubr.bf16.gmra.mrb[0].mxu0 %v827
  %v983 = vpop.f32.mrb[0].mxu0
  %v984 = vadd.f32 0.0, %v983
  %v985 = vpop.f32.mrb[0].mxu0
  %v986 = vpop.f32.mrb[0].mxu0
  %v987 = vadd.f32 0.0, %v986
  %v988 = vpop.f32.mrb[0].mxu0
  %989 = vdwg.mxu0
  %v990 = vsub.f32 0.0, %v864
  %v991 = vsub.f32 0.0, %v867
  %v992 = vsub.f32 0.0, %v872
  %v993 = vsub.f32 0.0, %v875
  %v994 = vsub.f32 0.0, %v880
  %v995 = vsub.f32 0.0, %v883
  %v996 = vsub.f32 0.0, %v888
  %v997 = vsub.f32 0.0, %v891
  %v998 = vsub.f32 0.0, %v896
  %v999 = vsub.f32 0.0, %v899
  %v1000 = vsub.f32 0.0, %v904
  %v1001 = vsub.f32 0.0, %v907
  %v1002 = vsub.f32 0.0, %v912
  %v1003 = vsub.f32 0.0, %v915
  %v1004 = vsub.f32 0.0, %v920
  %v1005 = vsub.f32 0.0, %v923
  %v1006 = vsub.f32 0.0, %v928
  %v1007 = vsub.f32 0.0, %v931
  %v1008 = vsub.f32 0.0, %v936
  %v1009 = vsub.f32 0.0, %v939
  %v1010 = vsub.f32 0.0, %v944
  %v1011 = vsub.f32 0.0, %v947
  %v1012 = vsub.f32 0.0, %v952
  %v1013 = vsub.f32 0.0, %v955
  %v1014 = vsub.f32 0.0, %v960
  %v1015 = vsub.f32 0.0, %v963
  %v1016 = vsub.f32 0.0, %v968
  %v1017 = vsub.f32 0.0, %v971
  %v1018 = vsub.f32 0.0, %v976
  %v1019 = vsub.f32 0.0, %v979
  %v1020 = vsub.f32 0.0, %v984
  %v1021 = vsub.f32 0.0, %v987
  %v1022 = vmul.f32 %v990, 1.442695
  %v1023 = vpow.pop %v1022
  %v1024 = vmul.f32 %v991, 1.442695
  %v1025 = vpow.pop %v1024
  %v1026 = vmul.f32 %v992, 1.442695
  %v1027 = vpow.pop %v1026
  %v1028 = vmul.f32 %v993, 1.442695
  %v1029 = vpow.pop %v1028
  %v1030 = vmul.f32 %v994, 1.442695
  %v1031 = vpow.pop %v1030
  %v1032 = vmul.f32 %v995, 1.442695
  %v1033 = vpow.pop %v1032
  %v1034 = vmul.f32 %v996, 1.442695
  %v1035 = vpow.pop %v1034
  %v1036 = vmul.f32 %v997, 1.442695
  %v1037 = vpow.pop %v1036
  %v1038 = vmul.f32 %v998, 1.442695
  %v1039 = vpow.pop %v1038
  %v1040 = vmul.f32 %v999, 1.442695
  %v1041 = vpow.pop %v1040
  %v1042 = vmul.f32 %v1000, 1.442695
  %v1043 = vpow.pop %v1042
  %v1044 = vmul.f32 %v1001, 1.442695
  %v1045 = vpow.pop %v1044
  %v1046 = vmul.f32 %v1002, 1.442695
  %v1047 = vpow.pop %v1046
  %v1048 = vmul.f32 %v1003, 1.442695
  %v1049 = vpow.pop %v1048
  %v1050 = vmul.f32 %v1004, 1.442695
  %v1051 = vpow.pop %v1050
  %v1052 = vmul.f32 %v1005, 1.442695
  %v1053 = vpow.pop %v1052
  %v1054 = vmul.f32 %v1006, 1.442695
  %v1055 = vpow.pop %v1054
  %v1056 = vmul.f32 %v1007, 1.442695
  %v1057 = vpow.pop %v1056
  %v1058 = vmul.f32 %v1008, 1.442695
  %v1059 = vpow.pop %v1058
  %v1060 = vmul.f32 %v1009, 1.442695
  %v1061 = vpow.pop %v1060
  %v1062 = vmul.f32 %v1010, 1.442695
  %v1063 = vpow.pop %v1062
  %v1064 = vmul.f32 %v1011, 1.442695
  %v1065 = vpow.pop %v1064
  %v1066 = vmul.f32 %v1012, 1.442695
  %v1067 = vpow.pop %v1066
  %v1068 = vmul.f32 %v1013, 1.442695
  %v1069 = vpow.pop %v1068
  %v1070 = vmul.f32 %v1014, 1.442695
  %v1071 = vpow.pop %v1070
  %v1072 = vmul.f32 %v1015, 1.442695
  %v1073 = vpow.pop %v1072
  %v1074 = vmul.f32 %v1016, 1.442695
  %v1075 = vpow.pop %v1074
  %v1076 = vmul.f32 %v1017, 1.442695
  %v1077 = vpow.pop %v1076
  %v1078 = vmul.f32 %v1018, 1.442695
  %v1079 = vpow.pop %v1078
  %v1080 = vmul.f32 %v1019, 1.442695
  %v1081 = vpow.pop %v1080
  %v1082 = vmul.f32 %v1020, 1.442695
  %v1083 = vpow.pop %v1082
  %v1084 = vmul.f32 %v1021, 1.442695
  %v1085 = vpow.pop %v1084
  %v1086 = vadd.f32 %v1023, 1.0
  %v1087 = vadd.f32 %v1025, 1.0
  %v1088 = vadd.f32 %v1027, 1.0
  %v1089 = vadd.f32 %v1029, 1.0
  %v1090 = vadd.f32 %v1031, 1.0
  %v1091 = vadd.f32 %v1033, 1.0
  %v1092 = vadd.f32 %v1035, 1.0
  %v1093 = vadd.f32 %v1037, 1.0
  %v1094 = vadd.f32 %v1039, 1.0
  %v1095 = vadd.f32 %v1041, 1.0
  %v1096 = vadd.f32 %v1043, 1.0
  %v1097 = vadd.f32 %v1045, 1.0
  %v1098 = vadd.f32 %v1047, 1.0
  %v1099 = vadd.f32 %v1049, 1.0
  %v1100 = vadd.f32 %v1051, 1.0
  %v1101 = vadd.f32 %v1053, 1.0
  %v1102 = vadd.f32 %v1055, 1.0
  %v1103 = vadd.f32 %v1057, 1.0
  %v1104 = vadd.f32 %v1059, 1.0
  %v1105 = vadd.f32 %v1061, 1.0
  %v1106 = vadd.f32 %v1063, 1.0
  %v1107 = vadd.f32 %v1065, 1.0
  %v1108 = vadd.f32 %v1067, 1.0
  %v1109 = vadd.f32 %v1069, 1.0
  %v1110 = vadd.f32 %v1071, 1.0
  %v1111 = vadd.f32 %v1073, 1.0
  %v1112 = vadd.f32 %v1075, 1.0
  %v1113 = vadd.f32 %v1077, 1.0
  %v1114 = vadd.f32 %v1079, 1.0
  %v1115 = vadd.f32 %v1081, 1.0
  %v1116 = vadd.f32 %v1083, 1.0
  %v1117 = vadd.f32 %v1085, 1.0
  %v1118 = vrcp.pop %v1086
  %v1119 = vrcp.pop %v1087
  %v1120 = vrcp.pop %v1088
  %v1121 = vrcp.pop %v1089
  %v1122 = vrcp.pop %v1090
  %v1123 = vrcp.pop %v1091
  %v1124 = vrcp.pop %v1092
  %v1125 = vrcp.pop %v1093
  %v1126 = vrcp.pop %v1094
  %v1127 = vrcp.pop %v1095
  %v1128 = vrcp.pop %v1096
  %v1129 = vrcp.pop %v1097
  %v1130 = vrcp.pop %v1098
  %v1131 = vrcp.pop %v1099
  %v1132 = vrcp.pop %v1100
  %v1133 = vrcp.pop %v1101
  %v1134 = vrcp.pop %v1102
  %v1135 = vrcp.pop %v1103
  %v1136 = vrcp.pop %v1104
  %v1137 = vrcp.pop %v1105
  %v1138 = vrcp.pop %v1106
  %v1139 = vrcp.pop %v1107
  %v1140 = vrcp.pop %v1108
  %v1141 = vrcp.pop %v1109
  %v1142 = vrcp.pop %v1110
  %v1143 = vrcp.pop %v1111
  %v1144 = vrcp.pop %v1112
  %v1145 = vrcp.pop %v1113
  %v1146 = vrcp.pop %v1114
  %v1147 = vrcp.pop %v1115
  %v1148 = vrcp.pop %v1116
  %v1149 = vrcp.pop %v1117
  %v1150 = vmul.f32 %v864, %v1118
  %v1151 = vmul.f32 %v867, %v1119
  %v1152 = vmul.f32 %v872, %v1120
  %v1153 = vmul.f32 %v875, %v1121
  %v1154 = vmul.f32 %v880, %v1122
  %v1155 = vmul.f32 %v883, %v1123
  %v1156 = vmul.f32 %v888, %v1124
  %v1157 = vmul.f32 %v891, %v1125
  %v1158 = vmul.f32 %v896, %v1126
  %v1159 = vmul.f32 %v899, %v1127
  %v1160 = vmul.f32 %v904, %v1128
  %v1161 = vmul.f32 %v907, %v1129
  %v1162 = vmul.f32 %v912, %v1130
  %v1163 = vmul.f32 %v915, %v1131
  %v1164 = vmul.f32 %v920, %v1132
  %v1165 = vmul.f32 %v923, %v1133
  %v1166 = vmul.f32 %v928, %v1134
  %v1167 = vmul.f32 %v931, %v1135
  %v1168 = vmul.f32 %v936, %v1136
  %v1169 = vmul.f32 %v939, %v1137
  %v1170 = vmul.f32 %v944, %v1138
  %v1171 = vmul.f32 %v947, %v1139
  %v1172 = vmul.f32 %v952, %v1140
  %v1173 = vmul.f32 %v955, %v1141
  %v1174 = vmul.f32 %v960, %v1142
  %v1175 = vmul.f32 %v963, %v1143
  %v1176 = vmul.f32 %v968, %v1144
  %v1177 = vmul.f32 %v971, %v1145
  %v1178 = vmul.f32 %v976, %v1146
  %v1179 = vmul.f32 %v979, %v1147
  %v1180 = vmul.f32 %v984, %v1148
  %v1181 = vmul.f32 %v987, %v1149
  %v1182 = vpack.c.bf16 %v1151, %v1150
  %v1183 = vpack.c.bf16 %v1153, %v1152
  %v1184 = vpack.c.bf16 %v1155, %v1154
  %v1185 = vpack.c.bf16 %v1157, %v1156
  %v1186 = vpack.c.bf16 %v1159, %v1158
  %v1187 = vpack.c.bf16 %v1161, %v1160
  %v1188 = vpack.c.bf16 %v1163, %v1162
  %v1189 = vpack.c.bf16 %v1165, %v1164
  %v1190 = vpack.c.bf16 %v1167, %v1166
  %v1191 = vpack.c.bf16 %v1169, %v1168
  %v1192 = vpack.c.bf16 %v1171, %v1170
  %v1193 = vpack.c.bf16 %v1173, %v1172
  %v1194 = vpack.c.bf16 %v1175, %v1174
  %v1195 = vpack.c.bf16 %v1177, %v1176
  %v1196 = vpack.c.bf16 %v1179, %v1178
  %v1197 = vpack.c.bf16 %v1181, %v1180
  %v1198 = vld [vmem:[%s3] sm:$0xf]
  %v1199 = vld [vmem:[%s3 + $0x4] sm:$0xf]
  %v1200 = vld [vmem:[%s3 + $0x8] sm:$0xf]
  %v1201 = vld [vmem:[%s3 + $0xc] sm:$0xf]
  %v1202 = vld [vmem:[%s3 + $0x10] sm:$0xf]
  %v1203 = vld [vmem:[%s3 + $0x14] sm:$0xf]
  %v1204 = vld [vmem:[%s3 + $0x18] sm:$0xf]
  %v1205 = vld [vmem:[%s3 + $0x1c] sm:$0xf]
  %v1214 = vunpack.c.l.b16 %v1198
  %v1215 = vunpack.c.l.b16 %v1199
  %v1216 = vunpack.c.l.b16 %v1200
  %v1217 = vunpack.c.l.b16 %v1201
  %v1218 = vunpack.c.l.b16 %v1202
  %v1219 = vunpack.c.l.b16 %v1203
  %v1220 = vunpack.c.l.b16 %v1204
  %v1221 = vunpack.c.l.b16 %v1205
  %v1222 = vpack.c.b16 %v1215, %v1214
  %v1223 = vpack.c.b16 %v1217, %v1216
  %v1224 = vpack.c.b16 %v1219, %v1218
  %v1225 = vpack.c.b16 %v1221, %v1220
  %vm1230 = vcmask 523264
  %v1232 = vsel %vm1230, %v1182, 0
  %v1235 = vsel %vm1230, %v1183, 0
  %v1238 = vsel %vm1230, %v1184, 0
  %v1241 = vsel %vm1230, %v1185, 0
  %v1244 = vsel %vm1230, %v1186, 0
  %v1247 = vsel %vm1230, %v1187, 0
  %v1250 = vsel %vm1230, %v1188, 0
  %v1253 = vsel %vm1230, %v1189, 0
  %v1256 = vsel %vm1230, %v1190, 0
  %v1259 = vsel %vm1230, %v1191, 0
  %v1262 = vsel %vm1230, %v1192, 0
  %v1265 = vsel %vm1230, %v1193, 0
  %v1268 = vsel %vm1230, %v1194, 0
  %v1271 = vsel %vm1230, %v1195, 0
  %v1274 = vsel %vm1230, %v1196, 0
  %v1277 = vsel %vm1230, %v1197, 0
  %1279 = vmatprep.subr.bf16.mxu0 0
  %1280 = vmatpush1.bf16.msra.mxu0 %v1222
  %1281 = vmatprep.subr.bf16.mxu0 0
  %1282 = vmatpush1.bf16.msra.mxu0 %v1223
  %1283 = vmatprep.subr.bf16.mxu0 0
  %1284 = vmatpush1.bf16.msra.mxu0 %v1224
  %1285 = vmatprep.subr.bf16.mxu0 0
  %1286 = vmatpush1.bf16.msra.mxu0 %v1225
  %1287 = vmatprep.subr.bf16.mxu0 0
  %1288 = vmatpush1.bf16.msra.mxu0 0
  %1289 = vmatprep.subr.bf16.mxu0 0
  %1290 = vmatpush1.bf16.msra.mxu0 0
  %1291 = vmatprep.subr.bf16.mxu0 0
  %1292 = vmatpush1.bf16.msra.mxu0 0
  %1293 = vmatprep.subr.bf16.mxu0 0
  %1294 = vmatpush1.bf16.msra.mxu0 0
  %1295 = vmatprep.subr.bf16.mxu0 0
  %1296 = vmatpush1.bf16.msra.mxu0 0
  %1297 = vmatprep.subr.bf16.mxu0 0
  %1298 = vmatpush1.bf16.msra.mxu0 0
  %1299 = vmatprep.subr.bf16.mxu0 0
  %1300 = vmatpush1.bf16.msra.mxu0 0
  %1301 = vmatprep.subr.bf16.mxu0 0
  %1302 = vmatpush1.bf16.msra.mxu0 0
  %1303 = vmatprep.subr.bf16.mxu0 0
  %1304 = vmatpush1.bf16.msra.mxu0 0
  %1305 = vmatprep.subr.bf16.mxu0 0
  %1306 = vmatpush1.bf16.msra.mxu0 0
  %1307 = vmatprep.subr.bf16.mxu0 0
  %1308 = vmatpush1.bf16.msra.mxu0 0
  %1309 = vmatprep.subr.bf16.mxu0 0
  %1310 = vmatpush1.bf16.msra.mxu0 0
  %1311 = vmatprep.mubr.bf16.mxu0 0
  %1312 = vmatmul.mubr.bf16.gmra.mrb[0].mxu0 %v1232
  %v1313 = vpop.f32.mrb[0].mxu0
  %v1314 = vadd.f32 0.0, %v1313
  %v1315 = vpop.f32.mrb[0].mxu0
  %v1316 = vpop.f32.mrb[0].mxu0
  %v1317 = vadd.f32 0.0, %v1316
  %v1318 = vpop.f32.mrb[0].mxu0
  %1319 = vmatprep.mubr.bf16.mxu0 0
  %1320 = vmatmul.mubr.bf16.gmra.mrb[0].mxu0 %v1235
  %v1321 = vpop.f32.mrb[0].mxu0
  %v1322 = vadd.f32 0.0, %v1321
  %v1323 = vpop.f32.mrb[0].mxu0
  %v1324 = vpop.f32.mrb[0].mxu0
  %v1325 = vadd.f32 0.0, %v1324
  %v1326 = vpop.f32.mrb[0].mxu0
  %1327 = vmatprep.mubr.bf16.mxu0 0
  %1328 = vmatmul.mubr.bf16.gmra.mrb[0].mxu0 %v1238
  %v1329 = vpop.f32.mrb[0].mxu0
  %v1330 = vadd.f32 0.0, %v1329
  %v1331 = vpop.f32.mrb[0].mxu0
  %v1332 = vpop.f32.mrb[0].mxu0
  %v1333 = vadd.f32 0.0, %v1332
  %v1334 = vpop.f32.mrb[0].mxu0
  %1335 = vmatprep.mubr.bf16.mxu0 0
  %1336 = vmatmul.mubr.bf16.gmra.mrb[0].mxu0 %v1241
  %v1337 = vpop.f32.mrb[0].mxu0
  %v1338 = vadd.f32 0.0, %v1337
  %v1339 = vpop.f32.mrb[0].mxu0
  %v1340 = vpop.f32.mrb[0].mxu0
  %v1341 = vadd.f32 0.0, %v1340
  %v1342 = vpop.f32.mrb[0].mxu0
  %1343 = vmatprep.mubr.bf16.mxu0 0
  %1344 = vmatmul.mubr.bf16.gmra.mrb[0].mxu0 %v1244
  %v1345 = vpop.f32.mrb[0].mxu0
  %v1346 = vadd.f32 0.0, %v1345
  %v1347 = vpop.f32.mrb[0].mxu0
  %v1348 = vpop.f32.mrb[0].mxu0
  %v1349 = vadd.f32 0.0, %v1348
  %v1350 = vpop.f32.mrb[0].mxu0
  %1351 = vmatprep.mubr.bf16.mxu0 0
  %1352 = vmatmul.mubr.bf16.gmra.mrb[0].mxu0 %v1247
  %v1353 = vpop.f32.mrb[0].mxu0
  %v1354 = vadd.f32 0.0, %v1353
  %v1355 = vpop.f32.mrb[0].mxu0
  %v1356 = vpop.f32.mrb[0].mxu0
  %v1357 = vadd.f32 0.0, %v1356
  %v1358 = vpop.f32.mrb[0].mxu0
  %1359 = vmatprep.mubr.bf16.mxu0 0
  %1360 = vmatmul.mubr.bf16.gmra.mrb[0].mxu0 %v1250
  %v1361 = vpop.f32.mrb[0].mxu0
  %v1362 = vadd.f32 0.0, %v1361
  %v1363 = vpop.f32.mrb[0].mxu0
  %v1364 = vpop.f32.mrb[0].mxu0
  %v1365 = vadd.f32 0.0, %v1364
  %v1366 = vpop.f32.mrb[0].mxu0
  %1367 = vmatprep.mubr.bf16.mxu0 0
  %1368 = vmatmul.mubr.bf16.gmra.mrb[0].mxu0 %v1253
  %v1369 = vpop.f32.mrb[0].mxu0
  %v1370 = vadd.f32 0.0, %v1369
  %v1371 = vpop.f32.mrb[0].mxu0
  %v1372 = vpop.f32.mrb[0].mxu0
  %v1373 = vadd.f32 0.0, %v1372
  %v1374 = vpop.f32.mrb[0].mxu0
  %1375 = vmatprep.mubr.bf16.mxu0 0
  %1376 = vmatmul.mubr.bf16.gmra.mrb[0].mxu0 %v1256
  %v1377 = vpop.f32.mrb[0].mxu0
  %v1378 = vadd.f32 0.0, %v1377
  %v1379 = vpop.f32.mrb[0].mxu0
  %v1380 = vpop.f32.mrb[0].mxu0
  %v1381 = vadd.f32 0.0, %v1380
  %v1382 = vpop.f32.mrb[0].mxu0
  %1383 = vmatprep.mubr.bf16.mxu0 0
  %1384 = vmatmul.mubr.bf16.gmra.mrb[0].mxu0 %v1259
  %v1385 = vpop.f32.mrb[0].mxu0
  %v1386 = vadd.f32 0.0, %v1385
  %v1387 = vpop.f32.mrb[0].mxu0
  %v1388 = vpop.f32.mrb[0].mxu0
  %v1389 = vadd.f32 0.0, %v1388
  %v1390 = vpop.f32.mrb[0].mxu0
  %1391 = vmatprep.mubr.bf16.mxu0 0
  %1392 = vmatmul.mubr.bf16.gmra.mrb[0].mxu0 %v1262
  %v1393 = vpop.f32.mrb[0].mxu0
  %v1394 = vadd.f32 0.0, %v1393
  %v1395 = vpop.f32.mrb[0].mxu0
  %v1396 = vpop.f32.mrb[0].mxu0
  %v1397 = vadd.f32 0.0, %v1396
  %v1398 = vpop.f32.mrb[0].mxu0
  %1399 = vmatprep.mubr.bf16.mxu0 0
  %1400 = vmatmul.mubr.bf16.gmra.mrb[0].mxu0 %v1265
  %v1401 = vpop.f32.mrb[0].mxu0
  %v1402 = vadd.f32 0.0, %v1401
  %v1403 = vpop.f32.mrb[0].mxu0
  %v1404 = vpop.f32.mrb[0].mxu0
  %v1405 = vadd.f32 0.0, %v1404
  %v1406 = vpop.f32.mrb[0].mxu0
  %1407 = vmatprep.mubr.bf16.mxu0 0
  %1408 = vmatmul.mubr.bf16.gmra.mrb[0].mxu0 %v1268
  %v1409 = vpop.f32.mrb[0].mxu0
  %v1410 = vadd.f32 0.0, %v1409
  %v1411 = vpop.f32.mrb[0].mxu0
  %v1412 = vpop.f32.mrb[0].mxu0
  %v1413 = vadd.f32 0.0, %v1412
  %v1414 = vpop.f32.mrb[0].mxu0
  %1415 = vmatprep.mubr.bf16.mxu0 0
  %1416 = vmatmul.mubr.bf16.gmra.mrb[0].mxu0 %v1271
  %v1417 = vpop.f32.mrb[0].mxu0
  %v1418 = vadd.f32 0.0, %v1417
  %v1419 = vpop.f32.mrb[0].mxu0
  %v1420 = vpop.f32.mrb[0].mxu0
  %v1421 = vadd.f32 0.0, %v1420
  %v1422 = vpop.f32.mrb[0].mxu0
  %1423 = vmatprep.mubr.bf16.mxu0 0
  %1424 = vmatmul.mubr.bf16.gmra.mrb[0].mxu0 %v1274
  %v1425 = vpop.f32.mrb[0].mxu0
  %v1426 = vadd.f32 0.0, %v1425
  %v1427 = vpop.f32.mrb[0].mxu0
  %v1428 = vpop.f32.mrb[0].mxu0
  %v1429 = vadd.f32 0.0, %v1428
  %v1430 = vpop.f32.mrb[0].mxu0
  %1431 = vmatprep.mubr.bf16.mxu0 0
  %1432 = vmatmul.mubr.bf16.gmra.mrb[0].mxu0 %v1277
  %v1433 = vpop.f32.mrb[0].mxu0
  %v1434 = vadd.f32 0.0, %v1433
  %v1435 = vpop.f32.mrb[0].mxu0
  %v1436 = vpop.f32.mrb[0].mxu0
  %v1437 = vadd.f32 0.0, %v1436
  %v1438 = vpop.f32.mrb[0].mxu0
  %1439 = vdwg.mxu0
  %v1440 = vmul.f32 %v1314, %v1314
  %v1441 = vmul.f32 %v1317, %v1317
  %v1442 = vmul.f32 %v1322, %v1322
  %v1443 = vmul.f32 %v1325, %v1325
  %v1444 = vmul.f32 %v1330, %v1330
  %v1445 = vmul.f32 %v1333, %v1333
  %v1446 = vmul.f32 %v1338, %v1338
  %v1447 = vmul.f32 %v1341, %v1341
  %v1448 = vmul.f32 %v1346, %v1346
  %v1449 = vmul.f32 %v1349, %v1349
  %v1450 = vmul.f32 %v1354, %v1354
  %v1451 = vmul.f32 %v1357, %v1357
  %v1452 = vmul.f32 %v1362, %v1362
  %v1453 = vmul.f32 %v1365, %v1365
  %v1454 = vmul.f32 %v1370, %v1370
  %v1455 = vmul.f32 %v1373, %v1373
  %v1456 = vmul.f32 %v1378, %v1378
  %v1457 = vmul.f32 %v1381, %v1381
  %v1458 = vmul.f32 %v1386, %v1386
  %v1459 = vmul.f32 %v1389, %v1389
  %v1460 = vmul.f32 %v1394, %v1394
  %v1461 = vmul.f32 %v1397, %v1397
  %v1462 = vmul.f32 %v1402, %v1402
  %v1463 = vmul.f32 %v1405, %v1405
  %v1464 = vmul.f32 %v1410, %v1410
  %v1465 = vmul.f32 %v1413, %v1413
  %v1466 = vmul.f32 %v1418, %v1418
  %v1467 = vmul.f32 %v1421, %v1421
  %v1468 = vmul.f32 %v1426, %v1426
  %v1469 = vmul.f32 %v1429, %v1429
  %v1470 = vmul.f32 %v1434, %v1434
  %v1471 = vmul.f32 %v1437, %v1437
  %v1472 = vsel %vm1230, %v1440, 0.0
  %1473 = vadd.xlane.f32.xlu0 %v1472
  %v1474 = vpop.xlane.xlu0 %1473
  %v1475 = vsel %vm1230, %v1441, 0.0
  %1476 = vadd.xlane.f32.xlu0 %v1475
  %v1477 = vpop.xlane.xlu0 %1476
  %v1478 = vsel %vm1230, %v1442, 0.0
  %1479 = vadd.xlane.f32.xlu0 %v1478
  %v1480 = vpop.xlane.xlu0 %1479
  %v1481 = vsel %vm1230, %v1443, 0.0
  %1482 = vadd.xlane.f32.xlu0 %v1481
  %v1483 = vpop.xlane.xlu0 %1482
  %v1484 = vsel %vm1230, %v1444, 0.0
  %1485 = vadd.xlane.f32.xlu0 %v1484
  %v1486 = vpop.xlane.xlu0 %1485
  %v1487 = vsel %vm1230, %v1445, 0.0
  %1488 = vadd.xlane.f32.xlu0 %v1487
  %v1489 = vpop.xlane.xlu0 %1488
  %v1490 = vsel %vm1230, %v1446, 0.0
  %1491 = vadd.xlane.f32.xlu0 %v1490
  %v1492 = vpop.xlane.xlu0 %1491
  %v1493 = vsel %vm1230, %v1447, 0.0
  %1494 = vadd.xlane.f32.xlu0 %v1493
  %v1495 = vpop.xlane.xlu0 %1494
  %v1496 = vsel %vm1230, %v1448, 0.0
  %1497 = vadd.xlane.f32.xlu0 %v1496
  %v1498 = vpop.xlane.xlu0 %1497
  %v1499 = vsel %vm1230, %v1449, 0.0
  %1500 = vadd.xlane.f32.xlu0 %v1499
  %v1501 = vpop.xlane.xlu0 %1500
  %v1502 = vsel %vm1230, %v1450, 0.0
  %1503 = vadd.xlane.f32.xlu0 %v1502
  %v1504 = vpop.xlane.xlu0 %1503
  %v1505 = vsel %vm1230, %v1451, 0.0
  %1506 = vadd.xlane.f32.xlu0 %v1505
  %v1507 = vpop.xlane.xlu0 %1506
  %v1508 = vsel %vm1230, %v1452, 0.0
  %1509 = vadd.xlane.f32.xlu0 %v1508
  %v1510 = vpop.xlane.xlu0 %1509
  %v1511 = vsel %vm1230, %v1453, 0.0
  %1512 = vadd.xlane.f32.xlu0 %v1511
  %v1513 = vpop.xlane.xlu0 %1512
  %v1514 = vsel %vm1230, %v1454, 0.0
  %1515 = vadd.xlane.f32.xlu0 %v1514
  %v1516 = vpop.xlane.xlu0 %1515
  %v1517 = vsel %vm1230, %v1455, 0.0
  %1518 = vadd.xlane.f32.xlu0 %v1517
  %v1519 = vpop.xlane.xlu0 %1518
  %v1520 = vsel %vm1230, %v1456, 0.0
  %1521 = vadd.xlane.f32.xlu0 %v1520
  %v1522 = vpop.xlane.xlu0 %1521
  %v1523 = vsel %vm1230, %v1457, 0.0
  %1524 = vadd.xlane.f32.xlu0 %v1523
  %v1525 = vpop.xlane.xlu0 %1524
  %v1526 = vsel %vm1230, %v1458, 0.0
  %1527 = vadd.xlane.f32.xlu0 %v1526
  %v1528 = vpop.xlane.xlu0 %1527
  %v1529 = vsel %vm1230, %v1459, 0.0
  %1530 = vadd.xlane.f32.xlu0 %v1529
  %v1531 = vpop.xlane.xlu0 %1530
  %v1532 = vsel %vm1230, %v1460, 0.0
  %1533 = vadd.xlane.f32.xlu0 %v1532
  %v1534 = vpop.xlane.xlu0 %1533
  %v1535 = vsel %vm1230, %v1461, 0.0
  %1536 = vadd.xlane.f32.xlu0 %v1535
  %v1537 = vpop.xlane.xlu0 %1536
  %v1538 = vsel %vm1230, %v1462, 0.0
  %1539 = vadd.xlane.f32.xlu0 %v1538
  %v1540 = vpop.xlane.xlu0 %1539
  %v1541 = vsel %vm1230, %v1463, 0.0
  %1542 = vadd.xlane.f32.xlu0 %v1541
  %v1543 = vpop.xlane.xlu0 %1542
  %v1544 = vsel %vm1230, %v1464, 0.0
  %1545 = vadd.xlane.f32.xlu0 %v1544
  %v1546 = vpop.xlane.xlu0 %1545
  %v1547 = vsel %vm1230, %v1465, 0.0
  %1548 = vadd.xlane.f32.xlu0 %v1547
  %v1549 = vpop.xlane.xlu0 %1548
  %v1550 = vsel %vm1230, %v1466, 0.0
  %1551 = vadd.xlane.f32.xlu0 %v1550
  %v1552 = vpop.xlane.xlu0 %1551
  %v1553 = vsel %vm1230, %v1467, 0.0
  %1554 = vadd.xlane.f32.xlu0 %v1553
  %v1555 = vpop.xlane.xlu0 %1554
  %v1556 = vsel %vm1230, %v1468, 0.0
  %1557 = vadd.xlane.f32.xlu0 %v1556
  %v1558 = vpop.xlane.xlu0 %1557
  %v1559 = vsel %vm1230, %v1469, 0.0
  %1560 = vadd.xlane.f32.xlu0 %v1559
  %v1561 = vpop.xlane.xlu0 %1560
  %v1562 = vsel %vm1230, %v1470, 0.0
  %1563 = vadd.xlane.f32.xlu0 %v1562
  %v1564 = vpop.xlane.xlu0 %1563
  %v1565 = vsel %vm1230, %v1471, 0.0
  %1566 = vadd.xlane.f32.xlu0 %v1565
  %v1567 = vpop.xlane.xlu0 %1566
  %v1568 = vadd.f32 %v1474, 1e-08
  %v1569 = vadd.f32 %v1477, 1e-08
  %v1570 = vadd.f32 %v1480, 1e-08
  %v1571 = vadd.f32 %v1483, 1e-08
  %v1572 = vadd.f32 %v1486, 1e-08
  %v1573 = vadd.f32 %v1489, 1e-08
  %v1574 = vadd.f32 %v1492, 1e-08
  %v1575 = vadd.f32 %v1495, 1e-08
  %v1576 = vadd.f32 %v1498, 1e-08
  %v1577 = vadd.f32 %v1501, 1e-08
  %v1578 = vadd.f32 %v1504, 1e-08
  %v1579 = vadd.f32 %v1507, 1e-08
  %v1580 = vadd.f32 %v1510, 1e-08
  %v1581 = vadd.f32 %v1513, 1e-08
  %v1582 = vadd.f32 %v1516, 1e-08
  %v1583 = vadd.f32 %v1519, 1e-08
  %v1584 = vadd.f32 %v1522, 1e-08
  %v1585 = vadd.f32 %v1525, 1e-08
  %v1586 = vadd.f32 %v1528, 1e-08
  %v1587 = vadd.f32 %v1531, 1e-08
  %v1588 = vadd.f32 %v1534, 1e-08
  %v1589 = vadd.f32 %v1537, 1e-08
  %v1590 = vadd.f32 %v1540, 1e-08
  %v1591 = vadd.f32 %v1543, 1e-08
  %v1592 = vadd.f32 %v1546, 1e-08
  %v1593 = vadd.f32 %v1549, 1e-08
  %v1594 = vadd.f32 %v1552, 1e-08
  %v1595 = vadd.f32 %v1555, 1e-08
  %v1596 = vadd.f32 %v1558, 1e-08
  %v1597 = vadd.f32 %v1561, 1e-08
  %v1598 = vadd.f32 %v1564, 1e-08
  %v1599 = vadd.f32 %v1567, 1e-08
  %v1600 = vrsqrt.pop %v1568
  %v1601 = vrsqrt.pop %v1569
  %v1602 = vrsqrt.pop %v1570
  %v1603 = vrsqrt.pop %v1571
  %v1604 = vrsqrt.pop %v1572
  %v1605 = vrsqrt.pop %v1573
  %v1606 = vrsqrt.pop %v1574
  %v1607 = vrsqrt.pop %v1575
  %v1608 = vrsqrt.pop %v1576
  %v1609 = vrsqrt.pop %v1577
  %v1610 = vrsqrt.pop %v1578
  %v1611 = vrsqrt.pop %v1579
  %v1612 = vrsqrt.pop %v1580
  %v1613 = vrsqrt.pop %v1581
  %v1614 = vrsqrt.pop %v1582
  %v1615 = vrsqrt.pop %v1583
  %v1616 = vrsqrt.pop %v1584
  %v1617 = vrsqrt.pop %v1585
  %v1618 = vrsqrt.pop %v1586
  %v1619 = vrsqrt.pop %v1587
  %v1620 = vrsqrt.pop %v1588
  %v1621 = vrsqrt.pop %v1589
  %v1622 = vrsqrt.pop %v1590
  %v1623 = vrsqrt.pop %v1591
  %v1624 = vrsqrt.pop %v1592
  %v1625 = vrsqrt.pop %v1593
  %v1626 = vrsqrt.pop %v1594
  %v1627 = vrsqrt.pop %v1595
  %v1628 = vrsqrt.pop %v1596
  %v1629 = vrsqrt.pop %v1597
  %v1630 = vrsqrt.pop %v1598
  %v1631 = vrsqrt.pop %v1599
  %v1632 = vmul.f32 %v1314, %v1600
  %v1633 = vmul.f32 %v1317, %v1601
  %v1634 = vmul.f32 %v1322, %v1602
  %v1635 = vmul.f32 %v1325, %v1603
  %v1636 = vmul.f32 %v1330, %v1604
  %v1637 = vmul.f32 %v1333, %v1605
  %v1638 = vmul.f32 %v1338, %v1606
  %v1639 = vmul.f32 %v1341, %v1607
  %v1640 = vmul.f32 %v1346, %v1608
  %v1641 = vmul.f32 %v1349, %v1609
  %v1642 = vmul.f32 %v1354, %v1610
  %v1643 = vmul.f32 %v1357, %v1611
  %v1644 = vmul.f32 %v1362, %v1612
  %v1645 = vmul.f32 %v1365, %v1613
  %v1646 = vmul.f32 %v1370, %v1614
  %v1647 = vmul.f32 %v1373, %v1615
  %v1648 = vmul.f32 %v1378, %v1616
  %v1649 = vmul.f32 %v1381, %v1617
  %v1650 = vmul.f32 %v1386, %v1618
  %v1651 = vmul.f32 %v1389, %v1619
  %v1652 = vmul.f32 %v1394, %v1620
  %v1653 = vmul.f32 %v1397, %v1621
  %v1654 = vmul.f32 %v1402, %v1622
  %v1655 = vmul.f32 %v1405, %v1623
  %v1656 = vmul.f32 %v1410, %v1624
  %v1657 = vmul.f32 %v1413, %v1625
  %v1658 = vmul.f32 %v1418, %v1626
  %v1659 = vmul.f32 %v1421, %v1627
  %v1660 = vmul.f32 %v1426, %v1628
  %v1661 = vmul.f32 %v1429, %v1629
  %v1662 = vmul.f32 %v1434, %v1630
  %v1663 = vmul.f32 %v1437, %v1631
  %1664 = vst.msk [vmem:[%s4] sm:$0xff] %vm1230, %v1632
  %1665 = vst.msk [vmem:[%s4 + $0x8] sm:$0xff] %vm1230, %v1633
  %1666 = vst.msk [vmem:[%s4 + $0x10] sm:$0xff] %vm1230, %v1634
  %1667 = vst.msk [vmem:[%s4 + $0x18] sm:$0xff] %vm1230, %v1635
  %1668 = vst.msk [vmem:[%s4 + $0x20] sm:$0xff] %vm1230, %v1636
  %1669 = vst.msk [vmem:[%s4 + $0x28] sm:$0xff] %vm1230, %v1637
  %1670 = vst.msk [vmem:[%s4 + $0x30] sm:$0xff] %vm1230, %v1638
  %1671 = vst.msk [vmem:[%s4 + $0x38] sm:$0xff] %vm1230, %v1639
  %1672 = vst.msk [vmem:[%s4 + $0x40] sm:$0xff] %vm1230, %v1640
  %1673 = vst.msk [vmem:[%s4 + $0x48] sm:$0xff] %vm1230, %v1641
  %1674 = vst.msk [vmem:[%s4 + $0x50] sm:$0xff] %vm1230, %v1642
  %1675 = vst.msk [vmem:[%s4 + $0x58] sm:$0xff] %vm1230, %v1643
  %1676 = vst.msk [vmem:[%s4 + $0x60] sm:$0xff] %vm1230, %v1644
  %1677 = vst.msk [vmem:[%s4 + $0x68] sm:$0xff] %vm1230, %v1645
  %1678 = vst.msk [vmem:[%s4 + $0x70] sm:$0xff] %vm1230, %v1646
  %1679 = vst.msk [vmem:[%s4 + $0x78] sm:$0xff] %vm1230, %v1647
  %1680 = vst.msk [vmem:[%s4 + $0x80] sm:$0xff] %vm1230, %v1648
  %1681 = vst.msk [vmem:[%s4 + $0x88] sm:$0xff] %vm1230, %v1649
  %1682 = vst.msk [vmem:[%s4 + $0x90] sm:$0xff] %vm1230, %v1650
  %1683 = vst.msk [vmem:[%s4 + $0x98] sm:$0xff] %vm1230, %v1651
  %1684 = vst.msk [vmem:[%s4 + $0xa0] sm:$0xff] %vm1230, %v1652
  %1685 = vst.msk [vmem:[%s4 + $0xa8] sm:$0xff] %vm1230, %v1653
  %1686 = vst.msk [vmem:[%s4 + $0xb0] sm:$0xff] %vm1230, %v1654
  %1687 = vst.msk [vmem:[%s4 + $0xb8] sm:$0xff] %vm1230, %v1655
  %1688 = vst.msk [vmem:[%s4 + $0xc0] sm:$0xff] %vm1230, %v1656
  %1689 = vst.msk [vmem:[%s4 + $0xc8] sm:$0xff] %vm1230, %v1657
  %1690 = vst.msk [vmem:[%s4 + $0xd0] sm:$0xff] %vm1230, %v1658
  %1691 = vst.msk [vmem:[%s4 + $0xd8] sm:$0xff] %vm1230, %v1659
  %1692 = vst.msk [vmem:[%s4 + $0xe0] sm:$0xff] %vm1230, %v1660
  %1693 = vst.msk [vmem:[%s4 + $0xe8] sm:$0xff] %vm1230, %v1661
  %1694 = vst.msk [vmem:[%s4 + $0xf0] sm:$0xff] %vm1230, %v1662
  %1695 = vst.msk [vmem:[%s4 + $0xf8] sm:$0xff] %vm1230, %v1663
  // Predicated region
  $region18: #{apply.1} parent=0 // pred_check
    _
  $region19: #{apply.1} parent=0 // pred_check_branch
    %1697 = sbr.rel (0) target = $region21
  $region20: #{apply.1} parent=0 // pred_region
    _
  $region21: #{apply.1} parent=0 // pred_fallthru
    _
  // Predicated region
  $region22: #{apply.1} parent=0 // pred_check
    _
  $region23: #{apply.1} parent=0 // pred_check_branch
    %1699 = sbr.rel (0) target = $region25
  $region24: #{apply.1} parent=0 // pred_region
    _
  $region25: #{apply.1} parent=0 // pred_fallthru
    _

</llo_original>
